<compile_context>
chip_gen: v7x
topology: tpu7x:2x2x1
jax: 0.10.0
libtpu: 0.0.40
codegen_flags: <defaults>
</compile_context>

<pallas_src>
import jax
import jax.numpy as jnp
from jax.experimental import pallas as pl
from jax.experimental.pallas import tpu as pltpu

_LANES = 128


def _vdn_group_sum_kernel(q_ref, sel_ref, o_ref):
    # q_ref:   (TR, 128*N)  -- each row holds 128 groups of N adjacent agent Qs.
    # sel_ref: (128*N, 128) -- block-ones selection matrix, sel[i, g] = (i//N == g).
    # o_ref:   (TR, 128)    -- lane-dense group sums.
    # One small MXU matmul performs the grouped reduction AND the lane
    # compaction in a single op; f32 accumulation + HIGHEST precision keep it
    # numerically equivalent to a plain f32 sum.
    o_ref[...] = jnp.dot(
        q_ref[...],
        sel_ref[...],
        preferred_element_type=jnp.float32,
        precision=jax.lax.Precision.HIGHEST,
    ).astype(o_ref.dtype)


def vdn_net_forward(q, *, max_row_tile=512):
    """Pallas implementation of VDN_Net.forward.

    q: (B, T, N) array of per-agent Q values.
    Returns (B, T, 1): sum over the agent axis (keepdim), matching
    torch.sum(q, dim=-1, keepdim=True).
    """
    B, T, N = q.shape
    M = B * T

    # Rows of the lane-dense reshaped view (each row = 128 output timesteps).
    R = (M + _LANES - 1) // _LANES
    TR = min(max_row_tile, R)          # 512-row tile ~= 1 MiB input buffer (N=4, f32)
    R_pad = ((R + TR - 1) // TR) * TR  # pad so the grid divides evenly
    M_pad = R_pad * _LANES

    q_flat = q.reshape(M, N)
    if M_pad != M:
        # Zero padding is harmless for a sum; padded rows are sliced off below.
        q_flat = jnp.pad(q_flat, ((0, M_pad - M), (0, 0)))
    # Contiguous (free) reshape: row r holds timesteps m = r*128 .. r*128+127.
    q_dense = q_flat.reshape(R_pad, _LANES * N)

    # Constant block-ones selection matrix: sel[i, g] = 1 iff i // N == g.
    sel = (
        jnp.arange(_LANES * N)[:, None] // N == jnp.arange(_LANES)[None, :]
    ).astype(q.dtype)

    grid = (R_pad // TR,)
    out_dense = pl.pallas_call(
        _vdn_group_sum_kernel,
        out_shape=jax.ShapeDtypeStruct((R_pad, _LANES), q.dtype),
        grid=grid,
        in_specs=[
            pl.BlockSpec((TR, _LANES * N), lambda r: (r, 0)),
            # Same block index every step -> fetched once, stays resident in VMEM.
            pl.BlockSpec((_LANES * N, _LANES), lambda r: (0, 0)),
        ],
        out_specs=pl.BlockSpec((TR, _LANES), lambda r: (r, 0)),
        compiler_params=pltpu.CompilerParams(
            # Independent row axis: lets v7x split grid steps across its two
            # TensorCores; harmless no-op on v5e/v6e.
            dimension_semantics=("parallel",),
        ),
    )(q_dense, sel)

    # Free layout plumbing: drop padding, restore (B, T, 1) keepdim shape.
    return out_dense.reshape(M_pad)[:M].reshape(B, T, 1)


if __name__ == "__main__":
    key = jax.random.PRNGKey(0)
    batch_size, max_episode_len, n_agents = 2, 8, 4
    q = jax.random.normal(
        key, (batch_size, max_episode_len, n_agents), dtype=jnp.float32
    )

    out = vdn_net_forward(q)
    out = jax.block_until_ready(out)

    # Reference check against plain JAX (mirrors torch.sum(q, dim=-1, keepdim=True)).
    ref = jnp.sum(q, axis=-1, keepdims=True)
    assert out.shape == (batch_size, max_episode_len, 1), out.shape
    assert jnp.allclose(out, ref, atol=1e-5, rtol=1e-5), "mismatch vs reference"

    print("KERNEL_OK")
</pallas_src>

<mosaic_0001>
module attributes {stable_mosaic.version = 11 : i64} {
  func.func @_vdn_group_sum_kernel(%arg0: i32, %arg1: memref<1x512xf32, #tpu.memory_space<vmem>>, %arg2: memref<512x128xf32, #tpu.memory_space<vmem>>, %arg3: memref<1x128xf32, #tpu.memory_space<vmem>>) attributes {dimension_semantics = [#tpu.dimension_semantics<parallel>], iteration_bounds = array<i64: 1>, scalar_prefetch = 0 : i64, scratch_operands = 0 : i64, tpu.core_type = #tpu.core_type<tc>, window_params = [{transform_indices = @transform_0, window_bounds = array<i64: 1, 512>}, {pipeline_mode = #tpu.pipeline_mode<synchronous>, transform_indices = @transform_1, window_bounds = array<i64: 512, 128>}, {transform_indices = @transform_2, window_bounds = array<i64: 1, 128>}]} {
    %c0 = arith.constant 0 : index
    %c0_0 = arith.constant 0 : index
    %0 = vector.load %arg1[%c0, %c0_0] : memref<1x512xf32, #tpu.memory_space<vmem>>, vector<1x512xf32>
    %c0_1 = arith.constant 0 : index
    %c0_2 = arith.constant 0 : index
    %1 = vector.load %arg2[%c0_1, %c0_2] : memref<512x128xf32, #tpu.memory_space<vmem>>, vector<512x128xf32>
    %cst = arith.constant dense<0.000000e+00> : vector<1x128xf32>
    %2 = tpu.matmul %0, %1, %cst {dimension_numbers = #tpu.dot_dimension_numbers<[1], [0], [0], [1], [0, 0, 1, 1], [], []>, precision = #tpu.contract_precision<fp32>} : vector<1x512xf32>, vector<512x128xf32>, vector<1x128xf32> -> vector<1x128xf32>
    %c0_3 = arith.constant 0 : index
    %c0_4 = arith.constant 0 : index
    %3 = vector.load %arg3[%c0_3, %c0_4] : memref<1x128xf32, #tpu.memory_space<vmem>>, vector<1x128xf32>
    tpu.vector_store %arg3[%c0_3, %c0_4], %2 {strides = array<i32>} : memref<1x128xf32, #tpu.memory_space<vmem>>, vector<1x128xf32>,
    return
  }
  func.func @transform_0(%arg0: i32) -> (i32, i32) {
    %c0_i32 = arith.constant 0 : i32
    %c0_i32_0 = arith.constant 0 : i32
    return %arg0, %c0_i32 : i32, i32
  }
  func.func @transform_1(%arg0: i32) -> (i32, i32) {
    %c0_i32 = arith.constant 0 : i32
    %c0_i32_0 = arith.constant 0 : i32
    %c0_i32_1 = arith.constant 0 : i32
    return %c0_i32, %c0_i32_0 : i32, i32
  }
  func.func @transform_2(%arg0: i32) -> (i32, i32) {
    %c0_i32 = arith.constant 0 : i32
    %c0_i32_0 = arith.constant 0 : i32
    return %arg0, %c0_i32 : i32, i32
  }
}

</mosaic_0001>

<llo_original>
// kernel: tpu_custom_call.1
$region0: #{tpu_custom_call.1}
  #allocation0 [shape = 'u32[]', space=smem, size = 0x4, offset = 0x4, fixed_abs, tag = 'smem constant byte address 0x4 - core index']
  #allocation1 [shape = 'u32[144,128]{1,0:T(1,128)}', space=vmem, size = 0x12000, scoped, tag = 'internal scratch']
  %s0 = inlined_call_operand.hbm [shape: f32[1,512], index: 0, kind: input, shape index: {}]
  %s1 = inlined_call_operand.hbm [shape: f32[512,128], index: 1, kind: input, shape index: {}]
  %s2 = inlined_call_operand.hbm [shape: f32[1,128], index: 2, kind: output, shape index: {}]
  %s3 = sld [smem:[#allocation0]]
  $region26: #{tpu_custom_call.1} parent=0
    _
  %s5 = ssub.s32 1, %s3
  %s6 = scalar_select 0, %s5, %s3
  $region1: #{tpu_custom_call.1} parent=0
    #allocation2 [shape = 'u8[2048]{0}', space=vmem, size = 0x800, scoped, tag = 'input window, operand 0, single buffered']
    #allocation3 [shape = 's32[1]{0}', space=sflag, size = 0x4, scoped, tag = 'scoped memory for tpu_custom_call.1']
    #allocation4 [shape = 's32[1]{0}', space=sflag, size = 0x4, scoped, tag = 'scoped memory for tpu_custom_call.1']
    #allocation5 [shape = 'u8[262144]{0}', space=vmem, size = 0x40000, scoped, tag = 'input window, operand 1, single buffered']
    #allocation6 [shape = 's32[1]{0}', space=sflag, size = 0x4, scoped, tag = 'scoped memory for tpu_custom_call.1']
    #allocation7 [shape = 'u8[512]{0}', space=vmem, size = 0x400, scoped, tag = 'output window, operand 0, single buffered']
    %7 = vsyncpa [#allocation3], 0
    %8 = vsyncpa [#allocation6], 0
    %9 = vsyncpa [#allocation4], 0
    // Predicated region
    $region2: #{tpu_custom_call.1} parent=1 // pred_check
      _
    $region3: #{tpu_custom_call.1} parent=1 // pred_check_branch
      %11 = sbr.rel (0) target = $region5
    $region4: #{tpu_custom_call.1} parent=1 // pred_region
      %s13 = ssub.s32 64, 64
      %14 = vsyncadd [#allocation3], %s13
      %s16 = sshll.u32 [#allocation2], 4
      %s17 = int_to_ptr.vmem [resolvable:$true] %s16
      %19 = dma.hbm_to_vmem [thread:$0]  %s0, 64, %s17, [#allocation3]
    $region5: #{tpu_custom_call.1} parent=1 // pred_fallthru
      _
    // Predicated region
    $region6: #{tpu_custom_call.1} parent=1 // pred_check
      _
    $region7: #{tpu_custom_call.1} parent=1 // pred_check_branch
      %21 = sbr.rel (0) target = $region9
    $region8: #{tpu_custom_call.1} parent=1 // pred_region
      %s23 = ssub.s32 8192, 8192
      %24 = vsyncadd [#allocation6], %s23
      %s25 = sshll.u32 [#allocation5], 4
      %s26 = int_to_ptr.vmem [resolvable:$true] %s25
      %31 = dma.hbm_to_vmem [thread:$0]  %s1, 8192, %s26, [#allocation6], 128, 128, 8
    $region9: #{tpu_custom_call.1} parent=1 // pred_fallthru
      _
    // Predicated region
    $region10: #{tpu_custom_call.1} parent=1 // pred_check
      _
    $region11: #{tpu_custom_call.1} parent=1 // pred_check_branch
      %33 = sbr.rel (0) target = $region13
    $region12: #{tpu_custom_call.1} parent=1 // pred_region
      %34 = dma.done [#allocation3], 64
    $region13: #{tpu_custom_call.1} parent=1 // pred_fallthru
      _
    // Predicated region
    $region14: #{tpu_custom_call.1} parent=1 // pred_check
      _
    $region15: #{tpu_custom_call.1} parent=1 // pred_check_branch
      %36 = sbr.rel (0) target = $region17
    $region16: #{tpu_custom_call.1} parent=1 // pred_region
      %37 = dma.done [#allocation6], 8192
    $region17: #{tpu_custom_call.1} parent=1 // pred_fallthru
      _
    %v38 = vld [vmem:[#allocation2] sm:$0xf]
    %v39 = vld [vmem:[#allocation5] sm:$0xff]
    %v40 = vld [vmem:[#allocation5 + $0x8] sm:$0xff]
    %v41 = vld [vmem:[#allocation5 + $0x10] sm:$0xff]
    %v42 = vld [vmem:[#allocation5 + $0x18] sm:$0xff]
    %v43 = vld [vmem:[#allocation5 + $0x20] sm:$0xff]
    %v44 = vld [vmem:[#allocation5 + $0x28] sm:$0xff]
    %v45 = vld [vmem:[#allocation5 + $0x30] sm:$0xff]
    %v46 = vld [vmem:[#allocation5 + $0x38] sm:$0xff]
    %v47 = vld [vmem:[#allocation5 + $0x40] sm:$0xff]
    %v48 = vld [vmem:[#allocation5 + $0x48] sm:$0xff]
    %v49 = vld [vmem:[#allocation5 + $0x50] sm:$0xff]
    %v50 = vld [vmem:[#allocation5 + $0x58] sm:$0xff]
    %v51 = vld [vmem:[#allocation5 + $0x60] sm:$0xff]
    %v52 = vld [vmem:[#allocation5 + $0x68] sm:$0xff]
    %v53 = vld [vmem:[#allocation5 + $0x70] sm:$0xff]
    %v54 = vld [vmem:[#allocation5 + $0x78] sm:$0xff]
    %v55 = vld [vmem:[#allocation5 + $0x80] sm:$0xff]
    %v56 = vld [vmem:[#allocation5 + $0x88] sm:$0xff]
    %v57 = vld [vmem:[#allocation5 + $0x90] sm:$0xff]
    %v58 = vld [vmem:[#allocation5 + $0x98] sm:$0xff]
    %v59 = vld [vmem:[#allocation5 + $0xa0] sm:$0xff]
    %v60 = vld [vmem:[#allocation5 + $0xa8] sm:$0xff]
    %v61 = vld [vmem:[#allocation5 + $0xb0] sm:$0xff]
    %v62 = vld [vmem:[#allocation5 + $0xb8] sm:$0xff]
    %v63 = vld [vmem:[#allocation5 + $0xc0] sm:$0xff]
    %v64 = vld [vmem:[#allocation5 + $0xc8] sm:$0xff]
    %v65 = vld [vmem:[#allocation5 + $0xd0] sm:$0xff]
    %v66 = vld [vmem:[#allocation5 + $0xd8] sm:$0xff]
    %v67 = vld [vmem:[#allocation5 + $0xe0] sm:$0xff]
    %v68 = vld [vmem:[#allocation5 + $0xe8] sm:$0xff]
    %v69 = vld [vmem:[#allocation5 + $0xf0] sm:$0xff]
    %v70 = vld [vmem:[#allocation5 + $0xf8] sm:$0xff]
    %v71 = vld [vmem:[#allocation5 + $0x100] sm:$0xff]
    %v72 = vld [vmem:[#allocation5 + $0x108] sm:$0xff]
    %v73 = vld [vmem:[#allocation5 + $0x110] sm:$0xff]
    %v74 = vld [vmem:[#allocation5 + $0x118] sm:$0xff]
    %v75 = vld [vmem:[#allocation5 + $0x120] sm:$0xff]
    %v76 = vld [vmem:[#allocation5 + $0x128] sm:$0xff]
    %v77 = vld [vmem:[#allocation5 + $0x130] sm:$0xff]
    %v78 = vld [vmem:[#allocation5 + $0x138] sm:$0xff]
    %v79 = vld [vmem:[#allocation5 + $0x140] sm:$0xff]
    %v80 = vld [vmem:[#allocation5 + $0x148] sm:$0xff]
    %v81 = vld [vmem:[#allocation5 + $0x150] sm:$0xff]
    %v82 = vld [vmem:[#allocation5 + $0x158] sm:$0xff]
    %v83 = vld [vmem:[#allocation5 + $0x160] sm:$0xff]
    %v84 = vld [vmem:[#allocation5 + $0x168] sm:$0xff]
    %v85 = vld [vmem:[#allocation5 + $0x170] sm:$0xff]
    %v86 = vld [vmem:[#allocation5 + $0x178] sm:$0xff]
    %v87 = vld [vmem:[#allocation5 + $0x180] sm:$0xff]
    %v88 = vld [vmem:[#allocation5 + $0x188] sm:$0xff]
    %v89 = vld [vmem:[#allocation5 + $0x190] sm:$0xff]
    %v90 = vld [vmem:[#allocation5 + $0x198] sm:$0xff]
    %v91 = vld [vmem:[#allocation5 + $0x1a0] sm:$0xff]
    %v92 = vld [vmem:[#allocation5 + $0x1a8] sm:$0xff]
    %v93 = vld [vmem:[#allocation5 + $0x1b0] sm:$0xff]
    %v94 = vld [vmem:[#allocation5 + $0x1b8] sm:$0xff]
    %v95 = vld [vmem:[#allocation5 + $0x1c0] sm:$0xff]
    %v96 = vld [vmem:[#allocation5 + $0x1c8] sm:$0xff]
    %v97 = vld [vmem:[#allocation5 + $0x1d0] sm:$0xff]
    %v98 = vld [vmem:[#allocation5 + $0x1d8] sm:$0xff]
    %v99 = vld [vmem:[#allocation5 + $0x1e0] sm:$0xff]
    %v100 = vld [vmem:[#allocation5 + $0x1e8] sm:$0xff]
    %v101 = vld [vmem:[#allocation5 + $0x1f0] sm:$0xff]
    %v102 = vld [vmem:[#allocation5 + $0x1f8] sm:$0xff]
    %v104 = vlaneseq
    %v105 = vshrl.u32 %v104, 7
    %v106 = vsub.s32 0, %v105
    %v107 = vrot.slane %v38, %v106
    %v108 = vlaneseq
    %v109 = vshrl.u32 %v108, 7
    %v110 = vsub.s32 1, %v109
    %v111 = vrot.slane %v38, %v110
    %v112 = vlaneseq
    %v113 = vshrl.u32 %v112, 7
    %v114 = vsub.s32 2, %v113
    %v115 = vrot.slane %v38, %v114
    %v116 = vlaneseq
    %v117 = vshrl.u32 %v116, 7
    %v118 = vsub.s32 3, %v117
    %v119 = vrot.slane %v38, %v118
    %124 = vmatprep.subr.mxu0 0.0
    %v125 = vand.u32 %v39, 4294901760
    %126 = vmatpush1.msra.mxu0 %v125
    %127 = vmatprep.subr.mxu0 0.0
    %v128 = vand.u32 %v40, 4294901760
    %129 = vmatpush1.msra.mxu0 %v128
    %130 = vmatprep.subr.mxu0 0.0
    %v131 = vand.u32 %v41, 4294901760
    %132 = vmatpush1.msra.mxu0 %v131
    %133 = vmatprep.subr.mxu0 0.0
    %v134 = vand.u32 %v42, 4294901760
    %135 = vmatpush1.msra.mxu0 %v134
    %136 = vmatprep.subr.mxu0 0.0
    %v137 = vand.u32 %v43, 4294901760
    %138 = vmatpush1.msra.mxu0 %v137
    %139 = vmatprep.subr.mxu0 0.0
    %v140 = vand.u32 %v44, 4294901760
    %141 = vmatpush1.msra.mxu0 %v140
    %142 = vmatprep.subr.mxu0 0.0
    %v143 = vand.u32 %v45, 4294901760
    %144 = vmatpush1.msra.mxu0 %v143
    %145 = vmatprep.subr.mxu0 0.0
    %v146 = vand.u32 %v46, 4294901760
    %147 = vmatpush1.msra.mxu0 %v146
    %148 = vmatprep.subr.mxu0 0.0
    %v149 = vand.u32 %v47, 4294901760
    %150 = vmatpush1.msra.mxu0 %v149
    %151 = vmatprep.subr.mxu0 0.0
    %v152 = vand.u32 %v48, 4294901760
    %153 = vmatpush1.msra.mxu0 %v152
    %154 = vmatprep.subr.mxu0 0.0
    %v155 = vand.u32 %v49, 4294901760
    %156 = vmatpush1.msra.mxu0 %v155
    %157 = vmatprep.subr.mxu0 0.0
    %v158 = vand.u32 %v50, 4294901760
    %159 = vmatpush1.msra.mxu0 %v158
    %160 = vmatprep.subr.mxu0 0.0
    %v161 = vand.u32 %v51, 4294901760
    %162 = vmatpush1.msra.mxu0 %v161
    %163 = vmatprep.subr.mxu0 0.0
    %v164 = vand.u32 %v52, 4294901760
    %165 = vmatpush1.msra.mxu0 %v164
    %166 = vmatprep.subr.mxu0 0.0
    %v167 = vand.u32 %v53, 4294901760
    %168 = vmatpush1.msra.mxu0 %v167
    %169 = vmatprep.subr.mxu0 0.0
    %v170 = vand.u32 %v54, 4294901760
    %171 = vmatpush1.msra.mxu0 %v170
    %172 = vmatprep.subr.mxu0 0.0
    %v173 = vand.u32 %v55, 4294901760
    %174 = vmatpush1.msra.mxu0 %v173
    %175 = vmatprep.subr.mxu0 0.0
    %v176 = vand.u32 %v56, 4294901760
    %177 = vmatpush1.msra.mxu0 %v176
    %178 = vmatprep.subr.mxu0 0.0
    %v179 = vand.u32 %v57, 4294901760
    %180 = vmatpush1.msra.mxu0 %v179
    %181 = vmatprep.subr.mxu0 0.0
    %v182 = vand.u32 %v58, 4294901760
    %183 = vmatpush1.msra.mxu0 %v182
    %184 = vmatprep.subr.mxu0 0.0
    %v185 = vand.u32 %v59, 4294901760
    %186 = vmatpush1.msra.mxu0 %v185
    %187 = vmatprep.subr.mxu0 0.0
    %v188 = vand.u32 %v60, 4294901760
    %189 = vmatpush1.msra.mxu0 %v188
    %190 = vmatprep.subr.mxu0 0.0
    %v191 = vand.u32 %v61, 4294901760
    %192 = vmatpush1.msra.mxu0 %v191
    %193 = vmatprep.subr.mxu0 0.0
    %v194 = vand.u32 %v62, 4294901760
    %195 = vmatpush1.msra.mxu0 %v194
    %196 = vmatprep.subr.mxu0 0.0
    %v197 = vand.u32 %v63, 4294901760
    %198 = vmatpush1.msra.mxu0 %v197
    %199 = vmatprep.subr.mxu0 0.0
    %v200 = vand.u32 %v64, 4294901760
    %201 = vmatpush1.msra.mxu0 %v200
    %202 = vmatprep.subr.mxu0 0.0
    %v203 = vand.u32 %v65, 4294901760
    %204 = vmatpush1.msra.mxu0 %v203
    %205 = vmatprep.subr.mxu0 0.0
    %v206 = vand.u32 %v66, 4294901760
    %207 = vmatpush1.msra.mxu0 %v206
    %208 = vmatprep.subr.mxu0 0.0
    %v209 = vand.u32 %v67, 4294901760
    %210 = vmatpush1.msra.mxu0 %v209
    %211 = vmatprep.subr.mxu0 0.0
    %v212 = vand.u32 %v68, 4294901760
    %213 = vmatpush1.msra.mxu0 %v212
    %214 = vmatprep.subr.mxu0 0.0
    %v215 = vand.u32 %v69, 4294901760
    %216 = vmatpush1.msra.mxu0 %v215
    %217 = vmatprep.subr.mxu0 0.0
    %v218 = vand.u32 %v70, 4294901760
    %219 = vmatpush1.msra.mxu0 %v218
    %v220 = vand.u32 %v111, 4294901760
    %v221 = vsub.f32 %v111, %v220
    %v222 = vand.u32 %v221, 4294901760
    %v223 = vsub.f32 %v221, %v222
    %v224 = vand.u32 %v223, 4294901760
    %225 = vmatprep.mubr.f32.mxu0 %v224
    %v226 = vand.u32 %v107, 4294901760
    %v227 = vsub.f32 %v107, %v226
    %v228 = vand.u32 %v227, 4294901760
    %v229 = vsub.f32 %v227, %v228
    %v230 = vand.u32 %v229, 4294901760
    %231 = vmatmul.mubr.f32.gmra.mrb[0].mxu0 %v230
    %v232 = vpop.f32.mrb[0].mxu0
    %v233 = vadd.f32 0.0, %v232
    %v234 = vpop.f32.mrb[0].mxu0
    %235 = vdwg.mxu0
    %236 = vmatprep.subr.mxu0 0.0
    %v237 = vand.u32 %v39, 4294901760
    %v238 = vsub.f32 %v39, %v237
    %v239 = vand.u32 %v238, 4294901760
    %v240 = vsub.f32 %v238, %v239
    %v241 = vand.u32 %v240, 4294901760
    %242 = vmatpush1.msra.mxu0 %v241
    %243 = vmatprep.subr.mxu0 0.0
    %v244 = vand.u32 %v40, 4294901760
    %v245 = vsub.f32 %v40, %v244
    %v246 = vand.u32 %v245, 4294901760
    %v247 = vsub.f32 %v245, %v246
    %v248 = vand.u32 %v247, 4294901760
    %249 = vmatpush1.msra.mxu0 %v248
    %250 = vmatprep.subr.mxu0 0.0
    %v251 = vand.u32 %v41, 4294901760
    %v252 = vsub.f32 %v41, %v251
    %v253 = vand.u32 %v252, 4294901760
    %v254 = vsub.f32 %v252, %v253
    %v255 = vand.u32 %v254, 4294901760
    %256 = vmatpush1.msra.mxu0 %v255
    %257 = vmatprep.subr.mxu0 0.0
    %v258 = vand.u32 %v42, 4294901760
    %v259 = vsub.f32 %v42, %v258
    %v260 = vand.u32 %v259, 4294901760
    %v261 = vsub.f32 %v259, %v260
    %v262 = vand.u32 %v261, 4294901760
    %263 = vmatpush1.msra.mxu0 %v262
    %264 = vmatprep.subr.mxu0 0.0
    %v265 = vand.u32 %v43, 4294901760
    %v266 = vsub.f32 %v43, %v265
    %v267 = vand.u32 %v266, 4294901760
    %v268 = vsub.f32 %v266, %v267
    %v269 = vand.u32 %v268, 4294901760
    %270 = vmatpush1.msra.mxu0 %v269
    %271 = vmatprep.subr.mxu0 0.0
    %v272 = vand.u32 %v44, 4294901760
    %v273 = vsub.f32 %v44, %v272
    %v274 = vand.u32 %v273, 4294901760
    %v275 = vsub.f32 %v273, %v274
    %v276 = vand.u32 %v275, 4294901760
    %277 = vmatpush1.msra.mxu0 %v276
    %278 = vmatprep.subr.mxu0 0.0
    %v279 = vand.u32 %v45, 4294901760
    %v280 = vsub.f32 %v45, %v279
    %v281 = vand.u32 %v280, 4294901760
    %v282 = vsub.f32 %v280, %v281
    %v283 = vand.u32 %v282, 4294901760
    %284 = vmatpush1.msra.mxu0 %v283
    %285 = vmatprep.subr.mxu0 0.0
    %v286 = vand.u32 %v46, 4294901760
    %v287 = vsub.f32 %v46, %v286
    %v288 = vand.u32 %v287, 4294901760
    %v289 = vsub.f32 %v287, %v288
    %v290 = vand.u32 %v289, 4294901760
    %291 = vmatpush1.msra.mxu0 %v290
    %292 = vmatprep.subr.mxu0 0.0
    %v293 = vand.u32 %v47, 4294901760
    %v294 = vsub.f32 %v47, %v293
    %v295 = vand.u32 %v294, 4294901760
    %v296 = vsub.f32 %v294, %v295
    %v297 = vand.u32 %v296, 4294901760
    %298 = vmatpush1.msra.mxu0 %v297
    %299 = vmatprep.subr.mxu0 0.0
    %v300 = vand.u32 %v48, 4294901760
    %v301 = vsub.f32 %v48, %v300
    %v302 = vand.u32 %v301, 4294901760
    %v303 = vsub.f32 %v301, %v302
    %v304 = vand.u32 %v303, 4294901760
    %305 = vmatpush1.msra.mxu0 %v304
    %306 = vmatprep.subr.mxu0 0.0
    %v307 = vand.u32 %v49, 4294901760
    %v308 = vsub.f32 %v49, %v307
    %v309 = vand.u32 %v308, 4294901760
    %v310 = vsub.f32 %v308, %v309
    %v311 = vand.u32 %v310, 4294901760
    %312 = vmatpush1.msra.mxu0 %v311
    %313 = vmatprep.subr.mxu0 0.0
    %v314 = vand.u32 %v50, 4294901760
    %v315 = vsub.f32 %v50, %v314
    %v316 = vand.u32 %v315, 4294901760
    %v317 = vsub.f32 %v315, %v316
    %v318 = vand.u32 %v317, 4294901760
    %319 = vmatpush1.msra.mxu0 %v318
    %320 = vmatprep.subr.mxu0 0.0
    %v321 = vand.u32 %v51, 4294901760
    %v322 = vsub.f32 %v51, %v321
    %v323 = vand.u32 %v322, 4294901760
    %v324 = vsub.f32 %v322, %v323
    %v325 = vand.u32 %v324, 4294901760
    %326 = vmatpush1.msra.mxu0 %v325
    %327 = vmatprep.subr.mxu0 0.0
    %v328 = vand.u32 %v52, 4294901760
    %v329 = vsub.f32 %v52, %v328
    %v330 = vand.u32 %v329, 4294901760
    %v331 = vsub.f32 %v329, %v330
    %v332 = vand.u32 %v331, 4294901760
    %333 = vmatpush1.msra.mxu0 %v332
    %334 = vmatprep.subr.mxu0 0.0
    %v335 = vand.u32 %v53, 4294901760
    %v336 = vsub.f32 %v53, %v335
    %v337 = vand.u32 %v336, 4294901760
    %v338 = vsub.f32 %v336, %v337
    %v339 = vand.u32 %v338, 4294901760
    %340 = vmatpush1.msra.mxu0 %v339
    %341 = vmatprep.subr.mxu0 0.0
    %v342 = vand.u32 %v54, 4294901760
    %v343 = vsub.f32 %v54, %v342
    %v344 = vand.u32 %v343, 4294901760
    %v345 = vsub.f32 %v343, %v344
    %v346 = vand.u32 %v345, 4294901760
    %347 = vmatpush1.msra.mxu0 %v346
    %348 = vmatprep.subr.mxu0 0.0
    %v349 = vand.u32 %v55, 4294901760
    %v350 = vsub.f32 %v55, %v349
    %v351 = vand.u32 %v350, 4294901760
    %v352 = vsub.f32 %v350, %v351
    %v353 = vand.u32 %v352, 4294901760
    %354 = vmatpush1.msra.mxu0 %v353
    %355 = vmatprep.subr.mxu0 0.0
    %v356 = vand.u32 %v56, 4294901760
    %v357 = vsub.f32 %v56, %v356
    %v358 = vand.u32 %v357, 4294901760
    %v359 = vsub.f32 %v357, %v358
    %v360 = vand.u32 %v359, 4294901760
    %361 = vmatpush1.msra.mxu0 %v360
    %362 = vmatprep.subr.mxu0 0.0
    %v363 = vand.u32 %v57, 4294901760
    %v364 = vsub.f32 %v57, %v363
    %v365 = vand.u32 %v364, 4294901760
    %v366 = vsub.f32 %v364, %v365
    %v367 = vand.u32 %v366, 4294901760
    %368 = vmatpush1.msra.mxu0 %v367
    %369 = vmatprep.subr.mxu0 0.0
    %v370 = vand.u32 %v58, 4294901760
    %v371 = vsub.f32 %v58, %v370
    %v372 = vand.u32 %v371, 4294901760
    %v373 = vsub.f32 %v371, %v372
    %v374 = vand.u32 %v373, 4294901760
    %375 = vmatpush1.msra.mxu0 %v374
    %376 = vmatprep.subr.mxu0 0.0
    %v377 = vand.u32 %v59, 4294901760
    %v378 = vsub.f32 %v59, %v377
    %v379 = vand.u32 %v378, 4294901760
    %v380 = vsub.f32 %v378, %v379
    %v381 = vand.u32 %v380, 4294901760
    %382 = vmatpush1.msra.mxu0 %v381
    %383 = vmatprep.subr.mxu0 0.0
    %v384 = vand.u32 %v60, 4294901760
    %v385 = vsub.f32 %v60, %v384
    %v386 = vand.u32 %v385, 4294901760
    %v387 = vsub.f32 %v385, %v386
    %v388 = vand.u32 %v387, 4294901760
    %389 = vmatpush1.msra.mxu0 %v388
    %390 = vmatprep.subr.mxu0 0.0
    %v391 = vand.u32 %v61, 4294901760
    %v392 = vsub.f32 %v61, %v391
    %v393 = vand.u32 %v392, 4294901760
    %v394 = vsub.f32 %v392, %v393
    %v395 = vand.u32 %v394, 4294901760
    %396 = vmatpush1.msra.mxu0 %v395
    %397 = vmatprep.subr.mxu0 0.0
    %v398 = vand.u32 %v62, 4294901760
    %v399 = vsub.f32 %v62, %v398
    %v400 = vand.u32 %v399, 4294901760
    %v401 = vsub.f32 %v399, %v400
    %v402 = vand.u32 %v401, 4294901760
    %403 = vmatpush1.msra.mxu0 %v402
    %404 = vmatprep.subr.mxu0 0.0
    %v405 = vand.u32 %v63, 4294901760
    %v406 = vsub.f32 %v63, %v405
    %v407 = vand.u32 %v406, 4294901760
    %v408 = vsub.f32 %v406, %v407
    %v409 = vand.u32 %v408, 4294901760
    %410 = vmatpush1.msra.mxu0 %v409
    %411 = vmatprep.subr.mxu0 0.0
    %v412 = vand.u32 %v64, 4294901760
    %v413 = vsub.f32 %v64, %v412
    %v414 = vand.u32 %v413, 4294901760
    %v415 = vsub.f32 %v413, %v414
    %v416 = vand.u32 %v415, 4294901760
    %417 = vmatpush1.msra.mxu0 %v416
    %418 = vmatprep.subr.mxu0 0.0
    %v419 = vand.u32 %v65, 4294901760
    %v420 = vsub.f32 %v65, %v419
    %v421 = vand.u32 %v420, 4294901760
    %v422 = vsub.f32 %v420, %v421
    %v423 = vand.u32 %v422, 4294901760
    %424 = vmatpush1.msra.mxu0 %v423
    %425 = vmatprep.subr.mxu0 0.0
    %v426 = vand.u32 %v66, 4294901760
    %v427 = vsub.f32 %v66, %v426
    %v428 = vand.u32 %v427, 4294901760
    %v429 = vsub.f32 %v427, %v428
    %v430 = vand.u32 %v429, 4294901760
    %431 = vmatpush1.msra.mxu0 %v430
    %432 = vmatprep.subr.mxu0 0.0
    %v433 = vand.u32 %v67, 4294901760
    %v434 = vsub.f32 %v67, %v433
    %v435 = vand.u32 %v434, 4294901760
    %v436 = vsub.f32 %v434, %v435
    %v437 = vand.u32 %v436, 4294901760
    %438 = vmatpush1.msra.mxu0 %v437
    %439 = vmatprep.subr.mxu0 0.0
    %v440 = vand.u32 %v68, 4294901760
    %v441 = vsub.f32 %v68, %v440
    %v442 = vand.u32 %v441, 4294901760
    %v443 = vsub.f32 %v441, %v442
    %v444 = vand.u32 %v443, 4294901760
    %445 = vmatpush1.msra.mxu0 %v444
    %446 = vmatprep.subr.mxu0 0.0
    %v447 = vand.u32 %v69, 4294901760
    %v448 = vsub.f32 %v69, %v447
    %v449 = vand.u32 %v448, 4294901760
    %v450 = vsub.f32 %v448, %v449
    %v451 = vand.u32 %v450, 4294901760
    %452 = vmatpush1.msra.mxu0 %v451
    %453 = vmatprep.subr.mxu0 0.0
    %v454 = vand.u32 %v70, 4294901760
    %v455 = vsub.f32 %v70, %v454
    %v456 = vand.u32 %v455, 4294901760
    %v457 = vsub.f32 %v455, %v456
    %v458 = vand.u32 %v457, 4294901760
    %459 = vmatpush1.msra.mxu0 %v458
    %v460 = vand.u32 %v111, 4294901760
    %461 = vmatprep.mubr.f32.mxu0 %v460
    %v462 = vand.u32 %v107, 4294901760
    %463 = vmatmul.mubr.f32.gmra.mrb[0].mxu0 %v462
    %v464 = vpop.f32.mrb[0].mxu0
    %v465 = vadd.f32 %v233, %v464
    %v466 = vpop.f32.mrb[0].mxu0
    %467 = vdwg.mxu0
    %468 = vmatprep.subr.mxu0 0.0
    %v469 = vand.u32 %v39, 4294901760
    %v470 = vsub.f32 %v39, %v469
    %471 = vmatpush1.msra.mxu0 %v470
    %472 = vmatprep.subr.mxu0 0.0
    %v473 = vand.u32 %v40, 4294901760
    %v474 = vsub.f32 %v40, %v473
    %475 = vmatpush1.msra.mxu0 %v474
    %476 = vmatprep.subr.mxu0 0.0
    %v477 = vand.u32 %v41, 4294901760
    %v478 = vsub.f32 %v41, %v477
    %479 = vmatpush1.msra.mxu0 %v478
    %480 = vmatprep.subr.mxu0 0.0
    %v481 = vand.u32 %v42, 4294901760
    %v482 = vsub.f32 %v42, %v481
    %483 = vmatpush1.msra.mxu0 %v482
    %484 = vmatprep.subr.mxu0 0.0
    %v485 = vand.u32 %v43, 4294901760
    %v486 = vsub.f32 %v43, %v485
    %487 = vmatpush1.msra.mxu0 %v486
    %488 = vmatprep.subr.mxu0 0.0
    %v489 = vand.u32 %v44, 4294901760
    %v490 = vsub.f32 %v44, %v489
    %491 = vmatpush1.msra.mxu0 %v490
    %492 = vmatprep.subr.mxu0 0.0
    %v493 = vand.u32 %v45, 4294901760
    %v494 = vsub.f32 %v45, %v493
    %495 = vmatpush1.msra.mxu0 %v494
    %496 = vmatprep.subr.mxu0 0.0
    %v497 = vand.u32 %v46, 4294901760
    %v498 = vsub.f32 %v46, %v497
    %499 = vmatpush1.msra.mxu0 %v498
    %500 = vmatprep.subr.mxu0 0.0
    %v501 = vand.u32 %v47, 4294901760
    %v502 = vsub.f32 %v47, %v501
    %503 = vmatpush1.msra.mxu0 %v502
    %504 = vmatprep.subr.mxu0 0.0
    %v505 = vand.u32 %v48, 4294901760
    %v506 = vsub.f32 %v48, %v505
    %507 = vmatpush1.msra.mxu0 %v506
    %508 = vmatprep.subr.mxu0 0.0
    %v509 = vand.u32 %v49, 4294901760
    %v510 = vsub.f32 %v49, %v509
    %511 = vmatpush1.msra.mxu0 %v510
    %512 = vmatprep.subr.mxu0 0.0
    %v513 = vand.u32 %v50, 4294901760
    %v514 = vsub.f32 %v50, %v513
    %515 = vmatpush1.msra.mxu0 %v514
    %516 = vmatprep.subr.mxu0 0.0
    %v517 = vand.u32 %v51, 4294901760
    %v518 = vsub.f32 %v51, %v517
    %519 = vmatpush1.msra.mxu0 %v518
    %520 = vmatprep.subr.mxu0 0.0
    %v521 = vand.u32 %v52, 4294901760
    %v522 = vsub.f32 %v52, %v521
    %523 = vmatpush1.msra.mxu0 %v522
    %524 = vmatprep.subr.mxu0 0.0
    %v525 = vand.u32 %v53, 4294901760
    %v526 = vsub.f32 %v53, %v525
    %527 = vmatpush1.msra.mxu0 %v526
    %528 = vmatprep.subr.mxu0 0.0
    %v529 = vand.u32 %v54, 4294901760
    %v530 = vsub.f32 %v54, %v529
    %531 = vmatpush1.msra.mxu0 %v530
    %532 = vmatprep.subr.mxu0 0.0
    %v533 = vand.u32 %v55, 4294901760
    %v534 = vsub.f32 %v55, %v533
    %535 = vmatpush1.msra.mxu0 %v534
    %536 = vmatprep.subr.mxu0 0.0
    %v537 = vand.u32 %v56, 4294901760
    %v538 = vsub.f32 %v56, %v537
    %539 = vmatpush1.msra.mxu0 %v538
    %540 = vmatprep.subr.mxu0 0.0
    %v541 = vand.u32 %v57, 4294901760
    %v542 = vsub.f32 %v57, %v541
    %543 = vmatpush1.msra.mxu0 %v542
    %544 = vmatprep.subr.mxu0 0.0
    %v545 = vand.u32 %v58, 4294901760
    %v546 = vsub.f32 %v58, %v545
    %547 = vmatpush1.msra.mxu0 %v546
    %548 = vmatprep.subr.mxu0 0.0
    %v549 = vand.u32 %v59, 4294901760
    %v550 = vsub.f32 %v59, %v549
    %551 = vmatpush1.msra.mxu0 %v550
    %552 = vmatprep.subr.mxu0 0.0
    %v553 = vand.u32 %v60, 4294901760
    %v554 = vsub.f32 %v60, %v553
    %555 = vmatpush1.msra.mxu0 %v554
    %556 = vmatprep.subr.mxu0 0.0
    %v557 = vand.u32 %v61, 4294901760
    %v558 = vsub.f32 %v61, %v557
    %559 = vmatpush1.msra.mxu0 %v558
    %560 = vmatprep.subr.mxu0 0.0
    %v561 = vand.u32 %v62, 4294901760
    %v562 = vsub.f32 %v62, %v561
    %563 = vmatpush1.msra.mxu0 %v562
    %564 = vmatprep.subr.mxu0 0.0
    %v565 = vand.u32 %v63, 4294901760
    %v566 = vsub.f32 %v63, %v565
    %567 = vmatpush1.msra.mxu0 %v566
    %568 = vmatprep.subr.mxu0 0.0
    %v569 = vand.u32 %v64, 4294901760
    %v570 = vsub.f32 %v64, %v569
    %571 = vmatpush1.msra.mxu0 %v570
    %572 = vmatprep.subr.mxu0 0.0
    %v573 = vand.u32 %v65, 4294901760
    %v574 = vsub.f32 %v65, %v573
    %575 = vmatpush1.msra.mxu0 %v574
    %576 = vmatprep.subr.mxu0 0.0
    %v577 = vand.u32 %v66, 4294901760
    %v578 = vsub.f32 %v66, %v577
    %579 = vmatpush1.msra.mxu0 %v578
    %580 = vmatprep.subr.mxu0 0.0
    %v581 = vand.u32 %v67, 4294901760
    %v582 = vsub.f32 %v67, %v581
    %583 = vmatpush1.msra.mxu0 %v582
    %584 = vmatprep.subr.mxu0 0.0
    %v585 = vand.u32 %v68, 4294901760
    %v586 = vsub.f32 %v68, %v585
    %587 = vmatpush1.msra.mxu0 %v586
    %588 = vmatprep.subr.mxu0 0.0
    %v589 = vand.u32 %v69, 4294901760
    %v590 = vsub.f32 %v69, %v589
    %591 = vmatpush1.msra.mxu0 %v590
    %592 = vmatprep.subr.mxu0 0.0
    %v593 = vand.u32 %v70, 4294901760
    %v594 = vsub.f32 %v70, %v593
    %595 = vmatpush1.msra.mxu0 %v594
    %v596 = vand.u32 %v111, 4294901760
    %v597 = vsub.f32 %v111, %v596
    %598 = vmatprep.mubr.f32.mxu0 %v597
    %v599 = vand.u32 %v107, 4294901760
    %v600 = vsub.f32 %v107, %v599
    %601 = vmatmul.mubr.f32.gmra.mrb[0].mxu0 %v600
    %v602 = vpop.f32.mrb[0].mxu0
    %v603 = vadd.f32 %v465, %v602
    %v604 = vpop.f32.mrb[0].mxu0
    %605 = vdwg.mxu0
    %606 = vmatprep.subr.mxu0 0.0
    %v607 = vand.u32 %v39, 4294901760
    %608 = vmatpush1.msra.mxu0 %v607
    %609 = vmatprep.subr.mxu0 0.0
    %v610 = vand.u32 %v40, 4294901760
    %611 = vmatpush1.msra.mxu0 %v610
    %612 = vmatprep.subr.mxu0 0.0
    %v613 = vand.u32 %v41, 4294901760
    %614 = vmatpush1.msra.mxu0 %v613
    %615 = vmatprep.subr.mxu0 0.0
    %v616 = vand.u32 %v42, 4294901760
    %617 = vmatpush1.msra.mxu0 %v616
    %618 = vmatprep.subr.mxu0 0.0
    %v619 = vand.u32 %v43, 4294901760
    %620 = vmatpush1.msra.mxu0 %v619
    %621 = vmatprep.subr.mxu0 0.0
    %v622 = vand.u32 %v44, 4294901760
    %623 = vmatpush1.msra.mxu0 %v622
    %624 = vmatprep.subr.mxu0 0.0
    %v625 = vand.u32 %v45, 4294901760
    %626 = vmatpush1.msra.mxu0 %v625
    %627 = vmatprep.subr.mxu0 0.0
    %v628 = vand.u32 %v46, 4294901760
    %629 = vmatpush1.msra.mxu0 %v628
    %630 = vmatprep.subr.mxu0 0.0
    %v631 = vand.u32 %v47, 4294901760
    %632 = vmatpush1.msra.mxu0 %v631
    %633 = vmatprep.subr.mxu0 0.0
    %v634 = vand.u32 %v48, 4294901760
    %635 = vmatpush1.msra.mxu0 %v634
    %636 = vmatprep.subr.mxu0 0.0
    %v637 = vand.u32 %v49, 4294901760
    %638 = vmatpush1.msra.mxu0 %v637
    %639 = vmatprep.subr.mxu0 0.0
    %v640 = vand.u32 %v50, 4294901760
    %641 = vmatpush1.msra.mxu0 %v640
    %642 = vmatprep.subr.mxu0 0.0
    %v643 = vand.u32 %v51, 4294901760
    %644 = vmatpush1.msra.mxu0 %v643
    %645 = vmatprep.subr.mxu0 0.0
    %v646 = vand.u32 %v52, 4294901760
    %647 = vmatpush1.msra.mxu0 %v646
    %648 = vmatprep.subr.mxu0 0.0
    %v649 = vand.u32 %v53, 4294901760
    %650 = vmatpush1.msra.mxu0 %v649
    %651 = vmatprep.subr.mxu0 0.0
    %v652 = vand.u32 %v54, 4294901760
    %653 = vmatpush1.msra.mxu0 %v652
    %654 = vmatprep.subr.mxu0 0.0
    %v655 = vand.u32 %v55, 4294901760
    %656 = vmatpush1.msra.mxu0 %v655
    %657 = vmatprep.subr.mxu0 0.0
    %v658 = vand.u32 %v56, 4294901760
    %659 = vmatpush1.msra.mxu0 %v658
    %660 = vmatprep.subr.mxu0 0.0
    %v661 = vand.u32 %v57, 4294901760
    %662 = vmatpush1.msra.mxu0 %v661
    %663 = vmatprep.subr.mxu0 0.0
    %v664 = vand.u32 %v58, 4294901760
    %665 = vmatpush1.msra.mxu0 %v664
    %666 = vmatprep.subr.mxu0 0.0
    %v667 = vand.u32 %v59, 4294901760
    %668 = vmatpush1.msra.mxu0 %v667
    %669 = vmatprep.subr.mxu0 0.0
    %v670 = vand.u32 %v60, 4294901760
    %671 = vmatpush1.msra.mxu0 %v670
    %672 = vmatprep.subr.mxu0 0.0
    %v673 = vand.u32 %v61, 4294901760
    %674 = vmatpush1.msra.mxu0 %v673
    %675 = vmatprep.subr.mxu0 0.0
    %v676 = vand.u32 %v62, 4294901760
    %677 = vmatpush1.msra.mxu0 %v676
    %678 = vmatprep.subr.mxu0 0.0
    %v679 = vand.u32 %v63, 4294901760
    %680 = vmatpush1.msra.mxu0 %v679
    %681 = vmatprep.subr.mxu0 0.0
    %v682 = vand.u32 %v64, 4294901760
    %683 = vmatpush1.msra.mxu0 %v682
    %684 = vmatprep.subr.mxu0 0.0
    %v685 = vand.u32 %v65, 4294901760
    %686 = vmatpush1.msra.mxu0 %v685
    %687 = vmatprep.subr.mxu0 0.0
    %v688 = vand.u32 %v66, 4294901760
    %689 = vmatpush1.msra.mxu0 %v688
    %690 = vmatprep.subr.mxu0 0.0
    %v691 = vand.u32 %v67, 4294901760
    %692 = vmatpush1.msra.mxu0 %v691
    %693 = vmatprep.subr.mxu0 0.0
    %v694 = vand.u32 %v68, 4294901760
    %695 = vmatpush1.msra.mxu0 %v694
    %696 = vmatprep.subr.mxu0 0.0
    %v697 = vand.u32 %v69, 4294901760
    %698 = vmatpush1.msra.mxu0 %v697
    %699 = vmatprep.subr.mxu0 0.0
    %v700 = vand.u32 %v70, 4294901760
    %701 = vmatpush1.msra.mxu0 %v700
    %v702 = vand.u32 %v111, 4294901760
    %v703 = vsub.f32 %v111, %v702
    %v704 = vand.u32 %v703, 4294901760
    %705 = vmatprep.mubr.f32.mxu0 %v704
    %v706 = vand.u32 %v107, 4294901760
    %v707 = vsub.f32 %v107, %v706
    %v708 = vand.u32 %v707, 4294901760
    %709 = vmatmul.mubr.f32.gmra.mrb[0].mxu0 %v708
    %v710 = vpop.f32.mrb[0].mxu0
    %v711 = vadd.f32 %v603, %v710
    %v712 = vpop.f32.mrb[0].mxu0
    %713 = vdwg.mxu0
    %714 = vmatprep.subr.mxu0 0.0
    %v715 = vand.u32 %v39, 4294901760
    %v716 = vsub.f32 %v39, %v715
    %v717 = vand.u32 %v716, 4294901760
    %718 = vmatpush1.msra.mxu0 %v717
    %719 = vmatprep.subr.mxu0 0.0
    %v720 = vand.u32 %v40, 4294901760
    %v721 = vsub.f32 %v40, %v720
    %v722 = vand.u32 %v721, 4294901760
    %723 = vmatpush1.msra.mxu0 %v722
    %724 = vmatprep.subr.mxu0 0.0
    %v725 = vand.u32 %v41, 4294901760
    %v726 = vsub.f32 %v41, %v725
    %v727 = vand.u32 %v726, 4294901760
    %728 = vmatpush1.msra.mxu0 %v727
    %729 = vmatprep.subr.mxu0 0.0
    %v730 = vand.u32 %v42, 4294901760
    %v731 = vsub.f32 %v42, %v730
    %v732 = vand.u32 %v731, 4294901760
    %733 = vmatpush1.msra.mxu0 %v732
    %734 = vmatprep.subr.mxu0 0.0
    %v735 = vand.u32 %v43, 4294901760
    %v736 = vsub.f32 %v43, %v735
    %v737 = vand.u32 %v736, 4294901760
    %738 = vmatpush1.msra.mxu0 %v737
    %739 = vmatprep.subr.mxu0 0.0
    %v740 = vand.u32 %v44, 4294901760
    %v741 = vsub.f32 %v44, %v740
    %v742 = vand.u32 %v741, 4294901760
    %743 = vmatpush1.msra.mxu0 %v742
    %744 = vmatprep.subr.mxu0 0.0
    %v745 = vand.u32 %v45, 4294901760
    %v746 = vsub.f32 %v45, %v745
    %v747 = vand.u32 %v746, 4294901760
    %748 = vmatpush1.msra.mxu0 %v747
    %749 = vmatprep.subr.mxu0 0.0
    %v750 = vand.u32 %v46, 4294901760
    %v751 = vsub.f32 %v46, %v750
    %v752 = vand.u32 %v751, 4294901760
    %753 = vmatpush1.msra.mxu0 %v752
    %754 = vmatprep.subr.mxu0 0.0
    %v755 = vand.u32 %v47, 4294901760
    %v756 = vsub.f32 %v47, %v755
    %v757 = vand.u32 %v756, 4294901760
    %758 = vmatpush1.msra.mxu0 %v757
    %759 = vmatprep.subr.mxu0 0.0
    %v760 = vand.u32 %v48, 4294901760
    %v761 = vsub.f32 %v48, %v760
    %v762 = vand.u32 %v761, 4294901760
    %763 = vmatpush1.msra.mxu0 %v762
    %764 = vmatprep.subr.mxu0 0.0
    %v765 = vand.u32 %v49, 4294901760
    %v766 = vsub.f32 %v49, %v765
    %v767 = vand.u32 %v766, 4294901760
    %768 = vmatpush1.msra.mxu0 %v767
    %769 = vmatprep.subr.mxu0 0.0
    %v770 = vand.u32 %v50, 4294901760
    %v771 = vsub.f32 %v50, %v770
    %v772 = vand.u32 %v771, 4294901760
    %773 = vmatpush1.msra.mxu0 %v772
    %774 = vmatprep.subr.mxu0 0.0
    %v775 = vand.u32 %v51, 4294901760
    %v776 = vsub.f32 %v51, %v775
    %v777 = vand.u32 %v776, 4294901760
    %778 = vmatpush1.msra.mxu0 %v777
    %779 = vmatprep.subr.mxu0 0.0
    %v780 = vand.u32 %v52, 4294901760
    %v781 = vsub.f32 %v52, %v780
    %v782 = vand.u32 %v781, 4294901760
    %783 = vmatpush1.msra.mxu0 %v782
    %784 = vmatprep.subr.mxu0 0.0
    %v785 = vand.u32 %v53, 4294901760
    %v786 = vsub.f32 %v53, %v785
    %v787 = vand.u32 %v786, 4294901760
    %788 = vmatpush1.msra.mxu0 %v787
    %789 = vmatprep.subr.mxu0 0.0
    %v790 = vand.u32 %v54, 4294901760
    %v791 = vsub.f32 %v54, %v790
    %v792 = vand.u32 %v791, 4294901760
    %793 = vmatpush1.msra.mxu0 %v792
    %794 = vmatprep.subr.mxu0 0.0
    %v795 = vand.u32 %v55, 4294901760
    %v796 = vsub.f32 %v55, %v795
    %v797 = vand.u32 %v796, 4294901760
    %798 = vmatpush1.msra.mxu0 %v797
    %799 = vmatprep.subr.mxu0 0.0
    %v800 = vand.u32 %v56, 4294901760
    %v801 = vsub.f32 %v56, %v800
    %v802 = vand.u32 %v801, 4294901760
    %803 = vmatpush1.msra.mxu0 %v802
    %804 = vmatprep.subr.mxu0 0.0
    %v805 = vand.u32 %v57, 4294901760
    %v806 = vsub.f32 %v57, %v805
    %v807 = vand.u32 %v806, 4294901760
    %808 = vmatpush1.msra.mxu0 %v807
    %809 = vmatprep.subr.mxu0 0.0
    %v810 = vand.u32 %v58, 4294901760
    %v811 = vsub.f32 %v58, %v810
    %v812 = vand.u32 %v811, 4294901760
    %813 = vmatpush1.msra.mxu0 %v812
    %814 = vmatprep.subr.mxu0 0.0
    %v815 = vand.u32 %v59, 4294901760
    %v816 = vsub.f32 %v59, %v815
    %v817 = vand.u32 %v816, 4294901760
    %818 = vmatpush1.msra.mxu0 %v817
    %819 = vmatprep.subr.mxu0 0.0
    %v820 = vand.u32 %v60, 4294901760
    %v821 = vsub.f32 %v60, %v820
    %v822 = vand.u32 %v821, 4294901760
    %823 = vmatpush1.msra.mxu0 %v822
    %824 = vmatprep.subr.mxu0 0.0
    %v825 = vand.u32 %v61, 4294901760
    %v826 = vsub.f32 %v61, %v825
    %v827 = vand.u32 %v826, 4294901760
    %828 = vmatpush1.msra.mxu0 %v827
    %829 = vmatprep.subr.mxu0 0.0
    %v830 = vand.u32 %v62, 4294901760
    %v831 = vsub.f32 %v62, %v830
    %v832 = vand.u32 %v831, 4294901760
    %833 = vmatpush1.msra.mxu0 %v832
    %834 = vmatprep.subr.mxu0 0.0
    %v835 = vand.u32 %v63, 4294901760
    %v836 = vsub.f32 %v63, %v835
    %v837 = vand.u32 %v836, 4294901760
    %838 = vmatpush1.msra.mxu0 %v837
    %839 = vmatprep.subr.mxu0 0.0
    %v840 = vand.u32 %v64, 4294901760
    %v841 = vsub.f32 %v64, %v840
    %v842 = vand.u32 %v841, 4294901760
    %843 = vmatpush1.msra.mxu0 %v842
    %844 = vmatprep.subr.mxu0 0.0
    %v845 = vand.u32 %v65, 4294901760
    %v846 = vsub.f32 %v65, %v845
    %v847 = vand.u32 %v846, 4294901760
    %848 = vmatpush1.msra.mxu0 %v847
    %849 = vmatprep.subr.mxu0 0.0
    %v850 = vand.u32 %v66, 4294901760
    %v851 = vsub.f32 %v66, %v850
    %v852 = vand.u32 %v851, 4294901760
    %853 = vmatpush1.msra.mxu0 %v852
    %854 = vmatprep.subr.mxu0 0.0
    %v855 = vand.u32 %v67, 4294901760
    %v856 = vsub.f32 %v67, %v855
    %v857 = vand.u32 %v856, 4294901760
    %858 = vmatpush1.msra.mxu0 %v857
    %859 = vmatprep.subr.mxu0 0.0
    %v860 = vand.u32 %v68, 4294901760
    %v861 = vsub.f32 %v68, %v860
    %v862 = vand.u32 %v861, 4294901760
    %863 = vmatpush1.msra.mxu0 %v862
    %864 = vmatprep.subr.mxu0 0.0
    %v865 = vand.u32 %v69, 4294901760
    %v866 = vsub.f32 %v69, %v865
    %v867 = vand.u32 %v866, 4294901760
    %868 = vmatpush1.msra.mxu0 %v867
    %869 = vmatprep.subr.mxu0 0.0
    %v870 = vand.u32 %v70, 4294901760
    %v871 = vsub.f32 %v70, %v870
    %v872 = vand.u32 %v871, 4294901760
    %873 = vmatpush1.msra.mxu0 %v872
    %v874 = vand.u32 %v111, 4294901760
    %875 = vmatprep.mubr.f32.mxu0 %v874
    %v876 = vand.u32 %v107, 4294901760
    %877 = vmatmul.mubr.f32.gmra.mrb[0].mxu0 %v876
    %v878 = vpop.f32.mrb[0].mxu0
    %v879 = vadd.f32 %v711, %v878
    %v880 = vpop.f32.mrb[0].mxu0
    %881 = vdwg.mxu0
    %882 = vmatprep.subr.mxu0 0.0
    %v883 = vand.u32 %v39, 4294901760
    %884 = vmatpush1.msra.mxu0 %v883
    %885 = vmatprep.subr.mxu0 0.0
    %v886 = vand.u32 %v40, 4294901760
    %887 = vmatpush1.msra.mxu0 %v886
    %888 = vmatprep.subr.mxu0 0.0
    %v889 = vand.u32 %v41, 4294901760
    %890 = vmatpush1.msra.mxu0 %v889
    %891 = vmatprep.subr.mxu0 0.0
    %v892 = vand.u32 %v42, 4294901760
    %893 = vmatpush1.msra.mxu0 %v892
    %894 = vmatprep.subr.mxu0 0.0
    %v895 = vand.u32 %v43, 4294901760
    %896 = vmatpush1.msra.mxu0 %v895
    %897 = vmatprep.subr.mxu0 0.0
    %v898 = vand.u32 %v44, 4294901760
    %899 = vmatpush1.msra.mxu0 %v898
    %900 = vmatprep.subr.mxu0 0.0
    %v901 = vand.u32 %v45, 4294901760
    %902 = vmatpush1.msra.mxu0 %v901
    %903 = vmatprep.subr.mxu0 0.0
    %v904 = vand.u32 %v46, 4294901760
    %905 = vmatpush1.msra.mxu0 %v904
    %906 = vmatprep.subr.mxu0 0.0
    %v907 = vand.u32 %v47, 4294901760
    %908 = vmatpush1.msra.mxu0 %v907
    %909 = vmatprep.subr.mxu0 0.0
    %v910 = vand.u32 %v48, 4294901760
    %911 = vmatpush1.msra.mxu0 %v910
    %912 = vmatprep.subr.mxu0 0.0
    %v913 = vand.u32 %v49, 4294901760
    %914 = vmatpush1.msra.mxu0 %v913
    %915 = vmatprep.subr.mxu0 0.0
    %v916 = vand.u32 %v50, 4294901760
    %917 = vmatpush1.msra.mxu0 %v916
    %918 = vmatprep.subr.mxu0 0.0
    %v919 = vand.u32 %v51, 4294901760
    %920 = vmatpush1.msra.mxu0 %v919
    %921 = vmatprep.subr.mxu0 0.0
    %v922 = vand.u32 %v52, 4294901760
    %923 = vmatpush1.msra.mxu0 %v922
    %924 = vmatprep.subr.mxu0 0.0
    %v925 = vand.u32 %v53, 4294901760
    %926 = vmatpush1.msra.mxu0 %v925
    %927 = vmatprep.subr.mxu0 0.0
    %v928 = vand.u32 %v54, 4294901760
    %929 = vmatpush1.msra.mxu0 %v928
    %930 = vmatprep.subr.mxu0 0.0
    %v931 = vand.u32 %v55, 4294901760
    %932 = vmatpush1.msra.mxu0 %v931
    %933 = vmatprep.subr.mxu0 0.0
    %v934 = vand.u32 %v56, 4294901760
    %935 = vmatpush1.msra.mxu0 %v934
    %936 = vmatprep.subr.mxu0 0.0
    %v937 = vand.u32 %v57, 4294901760
    %938 = vmatpush1.msra.mxu0 %v937
    %939 = vmatprep.subr.mxu0 0.0
    %v940 = vand.u32 %v58, 4294901760
    %941 = vmatpush1.msra.mxu0 %v940
    %942 = vmatprep.subr.mxu0 0.0
    %v943 = vand.u32 %v59, 4294901760
    %944 = vmatpush1.msra.mxu0 %v943
    %945 = vmatprep.subr.mxu0 0.0
    %v946 = vand.u32 %v60, 4294901760
    %947 = vmatpush1.msra.mxu0 %v946
    %948 = vmatprep.subr.mxu0 0.0
    %v949 = vand.u32 %v61, 4294901760
    %950 = vmatpush1.msra.mxu0 %v949
    %951 = vmatprep.subr.mxu0 0.0
    %v952 = vand.u32 %v62, 4294901760
    %953 = vmatpush1.msra.mxu0 %v952
    %954 = vmatprep.subr.mxu0 0.0
    %v955 = vand.u32 %v63, 4294901760
    %956 = vmatpush1.msra.mxu0 %v955
    %957 = vmatprep.subr.mxu0 0.0
    %v958 = vand.u32 %v64, 4294901760
    %959 = vmatpush1.msra.mxu0 %v958
    %960 = vmatprep.subr.mxu0 0.0
    %v961 = vand.u32 %v65, 4294901760
    %962 = vmatpush1.msra.mxu0 %v961
    %963 = vmatprep.subr.mxu0 0.0
    %v964 = vand.u32 %v66, 4294901760
    %965 = vmatpush1.msra.mxu0 %v964
    %966 = vmatprep.subr.mxu0 0.0
    %v967 = vand.u32 %v67, 4294901760
    %968 = vmatpush1.msra.mxu0 %v967
    %969 = vmatprep.subr.mxu0 0.0
    %v970 = vand.u32 %v68, 4294901760
    %971 = vmatpush1.msra.mxu0 %v970
    %972 = vmatprep.subr.mxu0 0.0
    %v973 = vand.u32 %v69, 4294901760
    %974 = vmatpush1.msra.mxu0 %v973
    %975 = vmatprep.subr.mxu0 0.0
    %v976 = vand.u32 %v70, 4294901760
    %977 = vmatpush1.msra.mxu0 %v976
    %v978 = vand.u32 %v111, 4294901760
    %979 = vmatprep.mubr.f32.mxu0 %v978
    %v980 = vand.u32 %v107, 4294901760
    %981 = vmatmul.mubr.f32.gmra.mrb[0].mxu0 %v980
    %v982 = vpop.f32.mrb[0].mxu0
    %v983 = vadd.f32 %v879, %v982
    %v984 = vpop.f32.mrb[0].mxu0
    %985 = vdwg.mxu0
    %986 = vmatprep.subr.mxu0 0.0
    %v987 = vand.u32 %v71, 4294901760
    %988 = vmatpush1.msra.mxu0 %v987
    %989 = vmatprep.subr.mxu0 0.0
    %v990 = vand.u32 %v72, 4294901760
    %991 = vmatpush1.msra.mxu0 %v990
    %992 = vmatprep.subr.mxu0 0.0
    %v993 = vand.u32 %v73, 4294901760
    %994 = vmatpush1.msra.mxu0 %v993
    %995 = vmatprep.subr.mxu0 0.0
    %v996 = vand.u32 %v74, 4294901760
    %997 = vmatpush1.msra.mxu0 %v996
    %998 = vmatprep.subr.mxu0 0.0
    %v999 = vand.u32 %v75, 4294901760
    %1000 = vmatpush1.msra.mxu0 %v999
    %1001 = vmatprep.subr.mxu0 0.0
    %v1002 = vand.u32 %v76, 4294901760
    %1003 = vmatpush1.msra.mxu0 %v1002
    %1004 = vmatprep.subr.mxu0 0.0
    %v1005 = vand.u32 %v77, 4294901760
    %1006 = vmatpush1.msra.mxu0 %v1005
    %1007 = vmatprep.subr.mxu0 0.0
    %v1008 = vand.u32 %v78, 4294901760
    %1009 = vmatpush1.msra.mxu0 %v1008
    %1010 = vmatprep.subr.mxu0 0.0
    %v1011 = vand.u32 %v79, 4294901760
    %1012 = vmatpush1.msra.mxu0 %v1011
    %1013 = vmatprep.subr.mxu0 0.0
    %v1014 = vand.u32 %v80, 4294901760
    %1015 = vmatpush1.msra.mxu0 %v1014
    %1016 = vmatprep.subr.mxu0 0.0
    %v1017 = vand.u32 %v81, 4294901760
    %1018 = vmatpush1.msra.mxu0 %v1017
    %1019 = vmatprep.subr.mxu0 0.0
    %v1020 = vand.u32 %v82, 4294901760
    %1021 = vmatpush1.msra.mxu0 %v1020
    %1022 = vmatprep.subr.mxu0 0.0
    %v1023 = vand.u32 %v83, 4294901760
    %1024 = vmatpush1.msra.mxu0 %v1023
    %1025 = vmatprep.subr.mxu0 0.0
    %v1026 = vand.u32 %v84, 4294901760
    %1027 = vmatpush1.msra.mxu0 %v1026
    %1028 = vmatprep.subr.mxu0 0.0
    %v1029 = vand.u32 %v85, 4294901760
    %1030 = vmatpush1.msra.mxu0 %v1029
    %1031 = vmatprep.subr.mxu0 0.0
    %v1032 = vand.u32 %v86, 4294901760
    %1033 = vmatpush1.msra.mxu0 %v1032
    %1034 = vmatprep.subr.mxu0 0.0
    %v1035 = vand.u32 %v87, 4294901760
    %1036 = vmatpush1.msra.mxu0 %v1035
    %1037 = vmatprep.subr.mxu0 0.0
    %v1038 = vand.u32 %v88, 4294901760
    %1039 = vmatpush1.msra.mxu0 %v1038
    %1040 = vmatprep.subr.mxu0 0.0
    %v1041 = vand.u32 %v89, 4294901760
    %1042 = vmatpush1.msra.mxu0 %v1041
    %1043 = vmatprep.subr.mxu0 0.0
    %v1044 = vand.u32 %v90, 4294901760
    %1045 = vmatpush1.msra.mxu0 %v1044
    %1046 = vmatprep.subr.mxu0 0.0
    %v1047 = vand.u32 %v91, 4294901760
    %1048 = vmatpush1.msra.mxu0 %v1047
    %1049 = vmatprep.subr.mxu0 0.0
    %v1050 = vand.u32 %v92, 4294901760
    %1051 = vmatpush1.msra.mxu0 %v1050
    %1052 = vmatprep.subr.mxu0 0.0
    %v1053 = vand.u32 %v93, 4294901760
    %1054 = vmatpush1.msra.mxu0 %v1053
    %1055 = vmatprep.subr.mxu0 0.0
    %v1056 = vand.u32 %v94, 4294901760
    %1057 = vmatpush1.msra.mxu0 %v1056
    %1058 = vmatprep.subr.mxu0 0.0
    %v1059 = vand.u32 %v95, 4294901760
    %1060 = vmatpush1.msra.mxu0 %v1059
    %1061 = vmatprep.subr.mxu0 0.0
    %v1062 = vand.u32 %v96, 4294901760
    %1063 = vmatpush1.msra.mxu0 %v1062
    %1064 = vmatprep.subr.mxu0 0.0
    %v1065 = vand.u32 %v97, 4294901760
    %1066 = vmatpush1.msra.mxu0 %v1065
    %1067 = vmatprep.subr.mxu0 0.0
    %v1068 = vand.u32 %v98, 4294901760
    %1069 = vmatpush1.msra.mxu0 %v1068
    %1070 = vmatprep.subr.mxu0 0.0
    %v1071 = vand.u32 %v99, 4294901760
    %1072 = vmatpush1.msra.mxu0 %v1071
    %1073 = vmatprep.subr.mxu0 0.0
    %v1074 = vand.u32 %v100, 4294901760
    %1075 = vmatpush1.msra.mxu0 %v1074
    %1076 = vmatprep.subr.mxu0 0.0
    %v1077 = vand.u32 %v101, 4294901760
    %1078 = vmatpush1.msra.mxu0 %v1077
    %1079 = vmatprep.subr.mxu0 0.0
    %v1080 = vand.u32 %v102, 4294901760
    %1081 = vmatpush1.msra.mxu0 %v1080
    %v1082 = vand.u32 %v119, 4294901760
    %v1083 = vsub.f32 %v119, %v1082
    %v1084 = vand.u32 %v1083, 4294901760
    %v1085 = vsub.f32 %v1083, %v1084
    %v1086 = vand.u32 %v1085, 4294901760
    %1087 = vmatprep.mubr.f32.mxu0 %v1086
    %v1088 = vand.u32 %v115, 4294901760
    %v1089 = vsub.f32 %v115, %v1088
    %v1090 = vand.u32 %v1089, 4294901760
    %v1091 = vsub.f32 %v1089, %v1090
    %v1092 = vand.u32 %v1091, 4294901760
    %1093 = vmatmul.mubr.f32.gmra.mrb[0].mxu0 %v1092
    %v1094 = vpop.f32.mrb[0].mxu0
    %v1095 = vadd.f32 %v983, %v1094
    %v1096 = vpop.f32.mrb[0].mxu0
    %1097 = vdwg.mxu0
    %1098 = vmatprep.subr.mxu0 0.0
    %v1099 = vand.u32 %v71, 4294901760
    %v1100 = vsub.f32 %v71, %v1099
    %v1101 = vand.u32 %v1100, 4294901760
    %v1102 = vsub.f32 %v1100, %v1101
    %v1103 = vand.u32 %v1102, 4294901760
    %1104 = vmatpush1.msra.mxu0 %v1103
    %1105 = vmatprep.subr.mxu0 0.0
    %v1106 = vand.u32 %v72, 4294901760
    %v1107 = vsub.f32 %v72, %v1106
    %v1108 = vand.u32 %v1107, 4294901760
    %v1109 = vsub.f32 %v1107, %v1108
    %v1110 = vand.u32 %v1109, 4294901760
    %1111 = vmatpush1.msra.mxu0 %v1110
    %1112 = vmatprep.subr.mxu0 0.0
    %v1113 = vand.u32 %v73, 4294901760
    %v1114 = vsub.f32 %v73, %v1113
    %v1115 = vand.u32 %v1114, 4294901760
    %v1116 = vsub.f32 %v1114, %v1115
    %v1117 = vand.u32 %v1116, 4294901760
    %1118 = vmatpush1.msra.mxu0 %v1117
    %1119 = vmatprep.subr.mxu0 0.0
    %v1120 = vand.u32 %v74, 4294901760
    %v1121 = vsub.f32 %v74, %v1120
    %v1122 = vand.u32 %v1121, 4294901760
    %v1123 = vsub.f32 %v1121, %v1122
    %v1124 = vand.u32 %v1123, 4294901760
    %1125 = vmatpush1.msra.mxu0 %v1124
    %1126 = vmatprep.subr.mxu0 0.0
    %v1127 = vand.u32 %v75, 4294901760
    %v1128 = vsub.f32 %v75, %v1127
    %v1129 = vand.u32 %v1128, 4294901760
    %v1130 = vsub.f32 %v1128, %v1129
    %v1131 = vand.u32 %v1130, 4294901760
    %1132 = vmatpush1.msra.mxu0 %v1131
    %1133 = vmatprep.subr.mxu0 0.0
    %v1134 = vand.u32 %v76, 4294901760
    %v1135 = vsub.f32 %v76, %v1134
    %v1136 = vand.u32 %v1135, 4294901760
    %v1137 = vsub.f32 %v1135, %v1136
    %v1138 = vand.u32 %v1137, 4294901760
    %1139 = vmatpush1.msra.mxu0 %v1138
    %1140 = vmatprep.subr.mxu0 0.0
    %v1141 = vand.u32 %v77, 4294901760
    %v1142 = vsub.f32 %v77, %v1141
    %v1143 = vand.u32 %v1142, 4294901760
    %v1144 = vsub.f32 %v1142, %v1143
    %v1145 = vand.u32 %v1144, 4294901760
    %1146 = vmatpush1.msra.mxu0 %v1145
    %1147 = vmatprep.subr.mxu0 0.0
    %v1148 = vand.u32 %v78, 4294901760
    %v1149 = vsub.f32 %v78, %v1148
    %v1150 = vand.u32 %v1149, 4294901760
    %v1151 = vsub.f32 %v1149, %v1150
    %v1152 = vand.u32 %v1151, 4294901760
    %1153 = vmatpush1.msra.mxu0 %v1152
    %1154 = vmatprep.subr.mxu0 0.0
    %v1155 = vand.u32 %v79, 4294901760
    %v1156 = vsub.f32 %v79, %v1155
    %v1157 = vand.u32 %v1156, 4294901760
    %v1158 = vsub.f32 %v1156, %v1157
    %v1159 = vand.u32 %v1158, 4294901760
    %1160 = vmatpush1.msra.mxu0 %v1159
    %1161 = vmatprep.subr.mxu0 0.0
    %v1162 = vand.u32 %v80, 4294901760
    %v1163 = vsub.f32 %v80, %v1162
    %v1164 = vand.u32 %v1163, 4294901760
    %v1165 = vsub.f32 %v1163, %v1164
    %v1166 = vand.u32 %v1165, 4294901760
    %1167 = vmatpush1.msra.mxu0 %v1166
    %1168 = vmatprep.subr.mxu0 0.0
    %v1169 = vand.u32 %v81, 4294901760
    %v1170 = vsub.f32 %v81, %v1169
    %v1171 = vand.u32 %v1170, 4294901760
    %v1172 = vsub.f32 %v1170, %v1171
    %v1173 = vand.u32 %v1172, 4294901760
    %1174 = vmatpush1.msra.mxu0 %v1173
    %1175 = vmatprep.subr.mxu0 0.0
    %v1176 = vand.u32 %v82, 4294901760
    %v1177 = vsub.f32 %v82, %v1176
    %v1178 = vand.u32 %v1177, 4294901760
    %v1179 = vsub.f32 %v1177, %v1178
    %v1180 = vand.u32 %v1179, 4294901760
    %1181 = vmatpush1.msra.mxu0 %v1180
    %1182 = vmatprep.subr.mxu0 0.0
    %v1183 = vand.u32 %v83, 4294901760
    %v1184 = vsub.f32 %v83, %v1183
    %v1185 = vand.u32 %v1184, 4294901760
    %v1186 = vsub.f32 %v1184, %v1185
    %v1187 = vand.u32 %v1186, 4294901760
    %1188 = vmatpush1.msra.mxu0 %v1187
    %1189 = vmatprep.subr.mxu0 0.0
    %v1190 = vand.u32 %v84, 4294901760
    %v1191 = vsub.f32 %v84, %v1190
    %v1192 = vand.u32 %v1191, 4294901760
    %v1193 = vsub.f32 %v1191, %v1192
    %v1194 = vand.u32 %v1193, 4294901760
    %1195 = vmatpush1.msra.mxu0 %v1194
    %1196 = vmatprep.subr.mxu0 0.0
    %v1197 = vand.u32 %v85, 4294901760
    %v1198 = vsub.f32 %v85, %v1197
    %v1199 = vand.u32 %v1198, 4294901760
    %v1200 = vsub.f32 %v1198, %v1199
    %v1201 = vand.u32 %v1200, 4294901760
    %1202 = vmatpush1.msra.mxu0 %v1201
    %1203 = vmatprep.subr.mxu0 0.0
    %v1204 = vand.u32 %v86, 4294901760
    %v1205 = vsub.f32 %v86, %v1204
    %v1206 = vand.u32 %v1205, 4294901760
    %v1207 = vsub.f32 %v1205, %v1206
    %v1208 = vand.u32 %v1207, 4294901760
    %1209 = vmatpush1.msra.mxu0 %v1208
    %1210 = vmatprep.subr.mxu0 0.0
    %v1211 = vand.u32 %v87, 4294901760
    %v1212 = vsub.f32 %v87, %v1211
    %v1213 = vand.u32 %v1212, 4294901760
    %v1214 = vsub.f32 %v1212, %v1213
    %v1215 = vand.u32 %v1214, 4294901760
    %1216 = vmatpush1.msra.mxu0 %v1215
    %1217 = vmatprep.subr.mxu0 0.0
    %v1218 = vand.u32 %v88, 4294901760
    %v1219 = vsub.f32 %v88, %v1218
    %v1220 = vand.u32 %v1219, 4294901760
    %v1221 = vsub.f32 %v1219, %v1220
    %v1222 = vand.u32 %v1221, 4294901760
    %1223 = vmatpush1.msra.mxu0 %v1222
    %1224 = vmatprep.subr.mxu0 0.0
    %v1225 = vand.u32 %v89, 4294901760
    %v1226 = vsub.f32 %v89, %v1225
    %v1227 = vand.u32 %v1226, 4294901760
    %v1228 = vsub.f32 %v1226, %v1227
    %v1229 = vand.u32 %v1228, 4294901760
    %1230 = vmatpush1.msra.mxu0 %v1229
    %1231 = vmatprep.subr.mxu0 0.0
    %v1232 = vand.u32 %v90, 4294901760
    %v1233 = vsub.f32 %v90, %v1232
    %v1234 = vand.u32 %v1233, 4294901760
    %v1235 = vsub.f32 %v1233, %v1234
    %v1236 = vand.u32 %v1235, 4294901760
    %1237 = vmatpush1.msra.mxu0 %v1236
    %1238 = vmatprep.subr.mxu0 0.0
    %v1239 = vand.u32 %v91, 4294901760
    %v1240 = vsub.f32 %v91, %v1239
    %v1241 = vand.u32 %v1240, 4294901760
    %v1242 = vsub.f32 %v1240, %v1241
    %v1243 = vand.u32 %v1242, 4294901760
    %1244 = vmatpush1.msra.mxu0 %v1243
    %1245 = vmatprep.subr.mxu0 0.0
    %v1246 = vand.u32 %v92, 4294901760
    %v1247 = vsub.f32 %v92, %v1246
    %v1248 = vand.u32 %v1247, 4294901760
    %v1249 = vsub.f32 %v1247, %v1248
    %v1250 = vand.u32 %v1249, 4294901760
    %1251 = vmatpush1.msra.mxu0 %v1250
    %1252 = vmatprep.subr.mxu0 0.0
    %v1253 = vand.u32 %v93, 4294901760
    %v1254 = vsub.f32 %v93, %v1253
    %v1255 = vand.u32 %v1254, 4294901760
    %v1256 = vsub.f32 %v1254, %v1255
    %v1257 = vand.u32 %v1256, 4294901760
    %1258 = vmatpush1.msra.mxu0 %v1257
    %1259 = vmatprep.subr.mxu0 0.0
    %v1260 = vand.u32 %v94, 4294901760
    %v1261 = vsub.f32 %v94, %v1260
    %v1262 = vand.u32 %v1261, 4294901760
    %v1263 = vsub.f32 %v1261, %v1262
    %v1264 = vand.u32 %v1263, 4294901760
    %1265 = vmatpush1.msra.mxu0 %v1264
    %1266 = vmatprep.subr.mxu0 0.0
    %v1267 = vand.u32 %v95, 4294901760
    %v1268 = vsub.f32 %v95, %v1267
    %v1269 = vand.u32 %v1268, 4294901760
    %v1270 = vsub.f32 %v1268, %v1269
    %v1271 = vand.u32 %v1270, 4294901760
    %1272 = vmatpush1.msra.mxu0 %v1271
    %1273 = vmatprep.subr.mxu0 0.0
    %v1274 = vand.u32 %v96, 4294901760
    %v1275 = vsub.f32 %v96, %v1274
    %v1276 = vand.u32 %v1275, 4294901760
    %v1277 = vsub.f32 %v1275, %v1276
    %v1278 = vand.u32 %v1277, 4294901760
    %1279 = vmatpush1.msra.mxu0 %v1278
    %1280 = vmatprep.subr.mxu0 0.0
    %v1281 = vand.u32 %v97, 4294901760
    %v1282 = vsub.f32 %v97, %v1281
    %v1283 = vand.u32 %v1282, 4294901760
    %v1284 = vsub.f32 %v1282, %v1283
    %v1285 = vand.u32 %v1284, 4294901760
    %1286 = vmatpush1.msra.mxu0 %v1285
    %1287 = vmatprep.subr.mxu0 0.0
    %v1288 = vand.u32 %v98, 4294901760
    %v1289 = vsub.f32 %v98, %v1288
    %v1290 = vand.u32 %v1289, 4294901760
    %v1291 = vsub.f32 %v1289, %v1290
    %v1292 = vand.u32 %v1291, 4294901760
    %1293 = vmatpush1.msra.mxu0 %v1292
    %1294 = vmatprep.subr.mxu0 0.0
    %v1295 = vand.u32 %v99, 4294901760
    %v1296 = vsub.f32 %v99, %v1295
    %v1297 = vand.u32 %v1296, 4294901760
    %v1298 = vsub.f32 %v1296, %v1297
    %v1299 = vand.u32 %v1298, 4294901760
    %1300 = vmatpush1.msra.mxu0 %v1299
    %1301 = vmatprep.subr.mxu0 0.0
    %v1302 = vand.u32 %v100, 4294901760
    %v1303 = vsub.f32 %v100, %v1302
    %v1304 = vand.u32 %v1303, 4294901760
    %v1305 = vsub.f32 %v1303, %v1304
    %v1306 = vand.u32 %v1305, 4294901760
    %1307 = vmatpush1.msra.mxu0 %v1306
    %1308 = vmatprep.subr.mxu0 0.0
    %v1309 = vand.u32 %v101, 4294901760
    %v1310 = vsub.f32 %v101, %v1309
    %v1311 = vand.u32 %v1310, 4294901760
    %v1312 = vsub.f32 %v1310, %v1311
    %v1313 = vand.u32 %v1312, 4294901760
    %1314 = vmatpush1.msra.mxu0 %v1313
    %1315 = vmatprep.subr.mxu0 0.0
    %v1316 = vand.u32 %v102, 4294901760
    %v1317 = vsub.f32 %v102, %v1316
    %v1318 = vand.u32 %v1317, 4294901760
    %v1319 = vsub.f32 %v1317, %v1318
    %v1320 = vand.u32 %v1319, 4294901760
    %1321 = vmatpush1.msra.mxu0 %v1320
    %v1322 = vand.u32 %v119, 4294901760
    %1323 = vmatprep.mubr.f32.mxu0 %v1322
    %v1324 = vand.u32 %v115, 4294901760
    %1325 = vmatmul.mubr.f32.gmra.mrb[0].mxu0 %v1324
    %v1326 = vpop.f32.mrb[0].mxu0
    %v1327 = vadd.f32 %v1095, %v1326
    %v1328 = vpop.f32.mrb[0].mxu0
    %1329 = vdwg.mxu0
    %1330 = vmatprep.subr.mxu0 0.0
    %v1331 = vand.u32 %v71, 4294901760
    %v1332 = vsub.f32 %v71, %v1331
    %1333 = vmatpush1.msra.mxu0 %v1332
    %1334 = vmatprep.subr.mxu0 0.0
    %v1335 = vand.u32 %v72, 4294901760
    %v1336 = vsub.f32 %v72, %v1335
    %1337 = vmatpush1.msra.mxu0 %v1336
    %1338 = vmatprep.subr.mxu0 0.0
    %v1339 = vand.u32 %v73, 4294901760
    %v1340 = vsub.f32 %v73, %v1339
    %1341 = vmatpush1.msra.mxu0 %v1340
    %1342 = vmatprep.subr.mxu0 0.0
    %v1343 = vand.u32 %v74, 4294901760
    %v1344 = vsub.f32 %v74, %v1343
    %1345 = vmatpush1.msra.mxu0 %v1344
    %1346 = vmatprep.subr.mxu0 0.0
    %v1347 = vand.u32 %v75, 4294901760
    %v1348 = vsub.f32 %v75, %v1347
    %1349 = vmatpush1.msra.mxu0 %v1348
    %1350 = vmatprep.subr.mxu0 0.0
    %v1351 = vand.u32 %v76, 4294901760
    %v1352 = vsub.f32 %v76, %v1351
    %1353 = vmatpush1.msra.mxu0 %v1352
    %1354 = vmatprep.subr.mxu0 0.0
    %v1355 = vand.u32 %v77, 4294901760
    %v1356 = vsub.f32 %v77, %v1355
    %1357 = vmatpush1.msra.mxu0 %v1356
    %1358 = vmatprep.subr.mxu0 0.0
    %v1359 = vand.u32 %v78, 4294901760
    %v1360 = vsub.f32 %v78, %v1359
    %1361 = vmatpush1.msra.mxu0 %v1360
    %1362 = vmatprep.subr.mxu0 0.0
    %v1363 = vand.u32 %v79, 4294901760
    %v1364 = vsub.f32 %v79, %v1363
    %1365 = vmatpush1.msra.mxu0 %v1364
    %1366 = vmatprep.subr.mxu0 0.0
    %v1367 = vand.u32 %v80, 4294901760
    %v1368 = vsub.f32 %v80, %v1367
    %1369 = vmatpush1.msra.mxu0 %v1368
    %1370 = vmatprep.subr.mxu0 0.0
    %v1371 = vand.u32 %v81, 4294901760
    %v1372 = vsub.f32 %v81, %v1371
    %1373 = vmatpush1.msra.mxu0 %v1372
    %1374 = vmatprep.subr.mxu0 0.0
    %v1375 = vand.u32 %v82, 4294901760
    %v1376 = vsub.f32 %v82, %v1375
    %1377 = vmatpush1.msra.mxu0 %v1376
    %1378 = vmatprep.subr.mxu0 0.0
    %v1379 = vand.u32 %v83, 4294901760
    %v1380 = vsub.f32 %v83, %v1379
    %1381 = vmatpush1.msra.mxu0 %v1380
    %1382 = vmatprep.subr.mxu0 0.0
    %v1383 = vand.u32 %v84, 4294901760
    %v1384 = vsub.f32 %v84, %v1383
    %1385 = vmatpush1.msra.mxu0 %v1384
    %1386 = vmatprep.subr.mxu0 0.0
    %v1387 = vand.u32 %v85, 4294901760
    %v1388 = vsub.f32 %v85, %v1387
    %1389 = vmatpush1.msra.mxu0 %v1388
    %1390 = vmatprep.subr.mxu0 0.0
    %v1391 = vand.u32 %v86, 4294901760
    %v1392 = vsub.f32 %v86, %v1391
    %1393 = vmatpush1.msra.mxu0 %v1392
    %1394 = vmatprep.subr.mxu0 0.0
    %v1395 = vand.u32 %v87, 4294901760
    %v1396 = vsub.f32 %v87, %v1395
    %1397 = vmatpush1.msra.mxu0 %v1396
    %1398 = vmatprep.subr.mxu0 0.0
    %v1399 = vand.u32 %v88, 4294901760
    %v1400 = vsub.f32 %v88, %v1399
    %1401 = vmatpush1.msra.mxu0 %v1400
    %1402 = vmatprep.subr.mxu0 0.0
    %v1403 = vand.u32 %v89, 4294901760
    %v1404 = vsub.f32 %v89, %v1403
    %1405 = vmatpush1.msra.mxu0 %v1404
    %1406 = vmatprep.subr.mxu0 0.0
    %v1407 = vand.u32 %v90, 4294901760
    %v1408 = vsub.f32 %v90, %v1407
    %1409 = vmatpush1.msra.mxu0 %v1408
    %1410 = vmatprep.subr.mxu0 0.0
    %v1411 = vand.u32 %v91, 4294901760
    %v1412 = vsub.f32 %v91, %v1411
    %1413 = vmatpush1.msra.mxu0 %v1412
    %1414 = vmatprep.subr.mxu0 0.0
    %v1415 = vand.u32 %v92, 4294901760
    %v1416 = vsub.f32 %v92, %v1415
    %1417 = vmatpush1.msra.mxu0 %v1416
    %1418 = vmatprep.subr.mxu0 0.0
    %v1419 = vand.u32 %v93, 4294901760
    %v1420 = vsub.f32 %v93, %v1419
    %1421 = vmatpush1.msra.mxu0 %v1420
    %1422 = vmatprep.subr.mxu0 0.0
    %v1423 = vand.u32 %v94, 4294901760
    %v1424 = vsub.f32 %v94, %v1423
    %1425 = vmatpush1.msra.mxu0 %v1424
    %1426 = vmatprep.subr.mxu0 0.0
    %v1427 = vand.u32 %v95, 4294901760
    %v1428 = vsub.f32 %v95, %v1427
    %1429 = vmatpush1.msra.mxu0 %v1428
    %1430 = vmatprep.subr.mxu0 0.0
    %v1431 = vand.u32 %v96, 4294901760
    %v1432 = vsub.f32 %v96, %v1431
    %1433 = vmatpush1.msra.mxu0 %v1432
    %1434 = vmatprep.subr.mxu0 0.0
    %v1435 = vand.u32 %v97, 4294901760
    %v1436 = vsub.f32 %v97, %v1435
    %1437 = vmatpush1.msra.mxu0 %v1436
    %1438 = vmatprep.subr.mxu0 0.0
    %v1439 = vand.u32 %v98, 4294901760
    %v1440 = vsub.f32 %v98, %v1439
    %1441 = vmatpush1.msra.mxu0 %v1440
    %1442 = vmatprep.subr.mxu0 0.0
    %v1443 = vand.u32 %v99, 4294901760
    %v1444 = vsub.f32 %v99, %v1443
    %1445 = vmatpush1.msra.mxu0 %v1444
    %1446 = vmatprep.subr.mxu0 0.0
    %v1447 = vand.u32 %v100, 4294901760
    %v1448 = vsub.f32 %v100, %v1447
    %1449 = vmatpush1.msra.mxu0 %v1448
    %1450 = vmatprep.subr.mxu0 0.0
    %v1451 = vand.u32 %v101, 4294901760
    %v1452 = vsub.f32 %v101, %v1451
    %1453 = vmatpush1.msra.mxu0 %v1452
    %1454 = vmatprep.subr.mxu0 0.0
    %v1455 = vand.u32 %v102, 4294901760
    %v1456 = vsub.f32 %v102, %v1455
    %1457 = vmatpush1.msra.mxu0 %v1456
    %v1458 = vand.u32 %v119, 4294901760
    %v1459 = vsub.f32 %v119, %v1458
    %1460 = vmatprep.mubr.f32.mxu0 %v1459
    %v1461 = vand.u32 %v115, 4294901760
    %v1462 = vsub.f32 %v115, %v1461
    %1463 = vmatmul.mubr.f32.gmra.mrb[0].mxu0 %v1462
    %v1464 = vpop.f32.mrb[0].mxu0
    %v1465 = vadd.f32 %v1327, %v1464
    %v1466 = vpop.f32.mrb[0].mxu0
    %1467 = vdwg.mxu0
    %1468 = vmatprep.subr.mxu0 0.0
    %v1469 = vand.u32 %v71, 4294901760
    %1470 = vmatpush1.msra.mxu0 %v1469
    %1471 = vmatprep.subr.mxu0 0.0
    %v1472 = vand.u32 %v72, 4294901760
    %1473 = vmatpush1.msra.mxu0 %v1472
    %1474 = vmatprep.subr.mxu0 0.0
    %v1475 = vand.u32 %v73, 4294901760
    %1476 = vmatpush1.msra.mxu0 %v1475
    %1477 = vmatprep.subr.mxu0 0.0
    %v1478 = vand.u32 %v74, 4294901760
    %1479 = vmatpush1.msra.mxu0 %v1478
    %1480 = vmatprep.subr.mxu0 0.0
    %v1481 = vand.u32 %v75, 4294901760
    %1482 = vmatpush1.msra.mxu0 %v1481
    %1483 = vmatprep.subr.mxu0 0.0
    %v1484 = vand.u32 %v76, 4294901760
    %1485 = vmatpush1.msra.mxu0 %v1484
    %1486 = vmatprep.subr.mxu0 0.0
    %v1487 = vand.u32 %v77, 4294901760
    %1488 = vmatpush1.msra.mxu0 %v1487
    %1489 = vmatprep.subr.mxu0 0.0
    %v1490 = vand.u32 %v78, 4294901760
    %1491 = vmatpush1.msra.mxu0 %v1490
    %1492 = vmatprep.subr.mxu0 0.0
    %v1493 = vand.u32 %v79, 4294901760
    %1494 = vmatpush1.msra.mxu0 %v1493
    %1495 = vmatprep.subr.mxu0 0.0
    %v1496 = vand.u32 %v80, 4294901760
    %1497 = vmatpush1.msra.mxu0 %v1496
    %1498 = vmatprep.subr.mxu0 0.0
    %v1499 = vand.u32 %v81, 4294901760
    %1500 = vmatpush1.msra.mxu0 %v1499
    %1501 = vmatprep.subr.mxu0 0.0
    %v1502 = vand.u32 %v82, 4294901760
    %1503 = vmatpush1.msra.mxu0 %v1502
    %1504 = vmatprep.subr.mxu0 0.0
    %v1505 = vand.u32 %v83, 4294901760
    %1506 = vmatpush1.msra.mxu0 %v1505
    %1507 = vmatprep.subr.mxu0 0.0
    %v1508 = vand.u32 %v84, 4294901760
    %1509 = vmatpush1.msra.mxu0 %v1508
    %1510 = vmatprep.subr.mxu0 0.0
    %v1511 = vand.u32 %v85, 4294901760
    %1512 = vmatpush1.msra.mxu0 %v1511
    %1513 = vmatprep.subr.mxu0 0.0
    %v1514 = vand.u32 %v86, 4294901760
    %1515 = vmatpush1.msra.mxu0 %v1514
    %1516 = vmatprep.subr.mxu0 0.0
    %v1517 = vand.u32 %v87, 4294901760
    %1518 = vmatpush1.msra.mxu0 %v1517
    %1519 = vmatprep.subr.mxu0 0.0
    %v1520 = vand.u32 %v88, 4294901760
    %1521 = vmatpush1.msra.mxu0 %v1520
    %1522 = vmatprep.subr.mxu0 0.0
    %v1523 = vand.u32 %v89, 4294901760
    %1524 = vmatpush1.msra.mxu0 %v1523
    %1525 = vmatprep.subr.mxu0 0.0
    %v1526 = vand.u32 %v90, 4294901760
    %1527 = vmatpush1.msra.mxu0 %v1526
    %1528 = vmatprep.subr.mxu0 0.0
    %v1529 = vand.u32 %v91, 4294901760
    %1530 = vmatpush1.msra.mxu0 %v1529
    %1531 = vmatprep.subr.mxu0 0.0
    %v1532 = vand.u32 %v92, 4294901760
    %1533 = vmatpush1.msra.mxu0 %v1532
    %1534 = vmatprep.subr.mxu0 0.0
    %v1535 = vand.u32 %v93, 4294901760
    %1536 = vmatpush1.msra.mxu0 %v1535
    %1537 = vmatprep.subr.mxu0 0.0
    %v1538 = vand.u32 %v94, 4294901760
    %1539 = vmatpush1.msra.mxu0 %v1538
    %1540 = vmatprep.subr.mxu0 0.0
    %v1541 = vand.u32 %v95, 4294901760
    %1542 = vmatpush1.msra.mxu0 %v1541
    %1543 = vmatprep.subr.mxu0 0.0
    %v1544 = vand.u32 %v96, 4294901760
    %1545 = vmatpush1.msra.mxu0 %v1544
    %1546 = vmatprep.subr.mxu0 0.0
    %v1547 = vand.u32 %v97, 4294901760
    %1548 = vmatpush1.msra.mxu0 %v1547
    %1549 = vmatprep.subr.mxu0 0.0
    %v1550 = vand.u32 %v98, 4294901760
    %1551 = vmatpush1.msra.mxu0 %v1550
    %1552 = vmatprep.subr.mxu0 0.0
    %v1553 = vand.u32 %v99, 4294901760
    %1554 = vmatpush1.msra.mxu0 %v1553
    %1555 = vmatprep.subr.mxu0 0.0
    %v1556 = vand.u32 %v100, 4294901760
    %1557 = vmatpush1.msra.mxu0 %v1556
    %1558 = vmatprep.subr.mxu0 0.0
    %v1559 = vand.u32 %v101, 4294901760
    %1560 = vmatpush1.msra.mxu0 %v1559
    %1561 = vmatprep.subr.mxu0 0.0
    %v1562 = vand.u32 %v102, 4294901760
    %1563 = vmatpush1.msra.mxu0 %v1562
    %v1564 = vand.u32 %v119, 4294901760
    %v1565 = vsub.f32 %v119, %v1564
    %v1566 = vand.u32 %v1565, 4294901760
    %1567 = vmatprep.mubr.f32.mxu0 %v1566
    %v1568 = vand.u32 %v115, 4294901760
    %v1569 = vsub.f32 %v115, %v1568
    %v1570 = vand.u32 %v1569, 4294901760
    %1571 = vmatmul.mubr.f32.gmra.mrb[0].mxu0 %v1570
    %v1572 = vpop.f32.mrb[0].mxu0
    %v1573 = vadd.f32 %v1465, %v1572
    %v1574 = vpop.f32.mrb[0].mxu0
    %1575 = vdwg.mxu0
    %1576 = vmatprep.subr.mxu0 0.0
    %v1577 = vand.u32 %v71, 4294901760
    %v1578 = vsub.f32 %v71, %v1577
    %v1579 = vand.u32 %v1578, 4294901760
    %1580 = vmatpush1.msra.mxu0 %v1579
    %1581 = vmatprep.subr.mxu0 0.0
    %v1582 = vand.u32 %v72, 4294901760
    %v1583 = vsub.f32 %v72, %v1582
    %v1584 = vand.u32 %v1583, 4294901760
    %1585 = vmatpush1.msra.mxu0 %v1584
    %1586 = vmatprep.subr.mxu0 0.0
    %v1587 = vand.u32 %v73, 4294901760
    %v1588 = vsub.f32 %v73, %v1587
    %v1589 = vand.u32 %v1588, 4294901760
    %1590 = vmatpush1.msra.mxu0 %v1589
    %1591 = vmatprep.subr.mxu0 0.0
    %v1592 = vand.u32 %v74, 4294901760
    %v1593 = vsub.f32 %v74, %v1592
    %v1594 = vand.u32 %v1593, 4294901760
    %1595 = vmatpush1.msra.mxu0 %v1594
    %1596 = vmatprep.subr.mxu0 0.0
    %v1597 = vand.u32 %v75, 4294901760
    %v1598 = vsub.f32 %v75, %v1597
    %v1599 = vand.u32 %v1598, 4294901760
    %1600 = vmatpush1.msra.mxu0 %v1599
    %1601 = vmatprep.subr.mxu0 0.0
    %v1602 = vand.u32 %v76, 4294901760
    %v1603 = vsub.f32 %v76, %v1602
    %v1604 = vand.u32 %v1603, 4294901760
    %1605 = vmatpush1.msra.mxu0 %v1604
    %1606 = vmatprep.subr.mxu0 0.0
    %v1607 = vand.u32 %v77, 4294901760
    %v1608 = vsub.f32 %v77, %v1607
    %v1609 = vand.u32 %v1608, 4294901760
    %1610 = vmatpush1.msra.mxu0 %v1609
    %1611 = vmatprep.subr.mxu0 0.0
    %v1612 = vand.u32 %v78, 4294901760
    %v1613 = vsub.f32 %v78, %v1612
    %v1614 = vand.u32 %v1613, 4294901760
    %1615 = vmatpush1.msra.mxu0 %v1614
    %1616 = vmatprep.subr.mxu0 0.0
    %v1617 = vand.u32 %v79, 4294901760
    %v1618 = vsub.f32 %v79, %v1617
    %v1619 = vand.u32 %v1618, 4294901760
    %1620 = vmatpush1.msra.mxu0 %v1619
    %1621 = vmatprep.subr.mxu0 0.0
    %v1622 = vand.u32 %v80, 4294901760
    %v1623 = vsub.f32 %v80, %v1622
    %v1624 = vand.u32 %v1623, 4294901760
    %1625 = vmatpush1.msra.mxu0 %v1624
    %1626 = vmatprep.subr.mxu0 0.0
    %v1627 = vand.u32 %v81, 4294901760
    %v1628 = vsub.f32 %v81, %v1627
    %v1629 = vand.u32 %v1628, 4294901760
    %1630 = vmatpush1.msra.mxu0 %v1629
    %1631 = vmatprep.subr.mxu0 0.0
    %v1632 = vand.u32 %v82, 4294901760
    %v1633 = vsub.f32 %v82, %v1632
    %v1634 = vand.u32 %v1633, 4294901760
    %1635 = vmatpush1.msra.mxu0 %v1634
    %1636 = vmatprep.subr.mxu0 0.0
    %v1637 = vand.u32 %v83, 4294901760
    %v1638 = vsub.f32 %v83, %v1637
    %v1639 = vand.u32 %v1638, 4294901760
    %1640 = vmatpush1.msra.mxu0 %v1639
    %1641 = vmatprep.subr.mxu0 0.0
    %v1642 = vand.u32 %v84, 4294901760
    %v1643 = vsub.f32 %v84, %v1642
    %v1644 = vand.u32 %v1643, 4294901760
    %1645 = vmatpush1.msra.mxu0 %v1644
    %1646 = vmatprep.subr.mxu0 0.0
    %v1647 = vand.u32 %v85, 4294901760
    %v1648 = vsub.f32 %v85, %v1647
    %v1649 = vand.u32 %v1648, 4294901760
    %1650 = vmatpush1.msra.mxu0 %v1649
    %1651 = vmatprep.subr.mxu0 0.0
    %v1652 = vand.u32 %v86, 4294901760
    %v1653 = vsub.f32 %v86, %v1652
    %v1654 = vand.u32 %v1653, 4294901760
    %1655 = vmatpush1.msra.mxu0 %v1654
    %1656 = vmatprep.subr.mxu0 0.0
    %v1657 = vand.u32 %v87, 4294901760
    %v1658 = vsub.f32 %v87, %v1657
    %v1659 = vand.u32 %v1658, 4294901760
    %1660 = vmatpush1.msra.mxu0 %v1659
    %1661 = vmatprep.subr.mxu0 0.0
    %v1662 = vand.u32 %v88, 4294901760
    %v1663 = vsub.f32 %v88, %v1662
    %v1664 = vand.u32 %v1663, 4294901760
    %1665 = vmatpush1.msra.mxu0 %v1664
    %1666 = vmatprep.subr.mxu0 0.0
    %v1667 = vand.u32 %v89, 4294901760
    %v1668 = vsub.f32 %v89, %v1667
    %v1669 = vand.u32 %v1668, 4294901760
    %1670 = vmatpush1.msra.mxu0 %v1669
    %1671 = vmatprep.subr.mxu0 0.0
    %v1672 = vand.u32 %v90, 4294901760
    %v1673 = vsub.f32 %v90, %v1672
    %v1674 = vand.u32 %v1673, 4294901760
    %1675 = vmatpush1.msra.mxu0 %v1674
    %1676 = vmatprep.subr.mxu0 0.0
    %v1677 = vand.u32 %v91, 4294901760
    %v1678 = vsub.f32 %v91, %v1677
    %v1679 = vand.u32 %v1678, 4294901760
    %1680 = vmatpush1.msra.mxu0 %v1679
    %1681 = vmatprep.subr.mxu0 0.0
    %v1682 = vand.u32 %v92, 4294901760
    %v1683 = vsub.f32 %v92, %v1682
    %v1684 = vand.u32 %v1683, 4294901760
    %1685 = vmatpush1.msra.mxu0 %v1684
    %1686 = vmatprep.subr.mxu0 0.0
    %v1687 = vand.u32 %v93, 4294901760
    %v1688 = vsub.f32 %v93, %v1687
    %v1689 = vand.u32 %v1688, 4294901760
    %1690 = vmatpush1.msra.mxu0 %v1689
    %1691 = vmatprep.subr.mxu0 0.0
    %v1692 = vand.u32 %v94, 4294901760
    %v1693 = vsub.f32 %v94, %v1692
    %v1694 = vand.u32 %v1693, 4294901760
    %1695 = vmatpush1.msra.mxu0 %v1694
    %1696 = vmatprep.subr.mxu0 0.0
    %v1697 = vand.u32 %v95, 4294901760
    %v1698 = vsub.f32 %v95, %v1697
    %v1699 = vand.u32 %v1698, 4294901760
    %1700 = vmatpush1.msra.mxu0 %v1699
    %1701 = vmatprep.subr.mxu0 0.0
    %v1702 = vand.u32 %v96, 4294901760
    %v1703 = vsub.f32 %v96, %v1702
    %v1704 = vand.u32 %v1703, 4294901760
    %1705 = vmatpush1.msra.mxu0 %v1704
    %1706 = vmatprep.subr.mxu0 0.0
    %v1707 = vand.u32 %v97, 4294901760
    %v1708 = vsub.f32 %v97, %v1707
    %v1709 = vand.u32 %v1708, 4294901760
    %1710 = vmatpush1.msra.mxu0 %v1709
    %1711 = vmatprep.subr.mxu0 0.0
    %v1712 = vand.u32 %v98, 4294901760
    %v1713 = vsub.f32 %v98, %v1712
    %v1714 = vand.u32 %v1713, 4294901760
    %1715 = vmatpush1.msra.mxu0 %v1714
    %1716 = vmatprep.subr.mxu0 0.0
    %v1717 = vand.u32 %v99, 4294901760
    %v1718 = vsub.f32 %v99, %v1717
    %v1719 = vand.u32 %v1718, 4294901760
    %1720 = vmatpush1.msra.mxu0 %v1719
    %1721 = vmatprep.subr.mxu0 0.0
    %v1722 = vand.u32 %v100, 4294901760
    %v1723 = vsub.f32 %v100, %v1722
    %v1724 = vand.u32 %v1723, 4294901760
    %1725 = vmatpush1.msra.mxu0 %v1724
    %1726 = vmatprep.subr.mxu0 0.0
    %v1727 = vand.u32 %v101, 4294901760
    %v1728 = vsub.f32 %v101, %v1727
    %v1729 = vand.u32 %v1728, 4294901760
    %1730 = vmatpush1.msra.mxu0 %v1729
    %1731 = vmatprep.subr.mxu0 0.0
    %v1732 = vand.u32 %v102, 4294901760
    %v1733 = vsub.f32 %v102, %v1732
    %v1734 = vand.u32 %v1733, 4294901760
    %1735 = vmatpush1.msra.mxu0 %v1734
    %v1736 = vand.u32 %v119, 4294901760
    %1737 = vmatprep.mubr.f32.mxu0 %v1736
    %v1738 = vand.u32 %v115, 4294901760
    %1739 = vmatmul.mubr.f32.gmra.mrb[0].mxu0 %v1738
    %v1740 = vpop.f32.mrb[0].mxu0
    %v1741 = vadd.f32 %v1573, %v1740
    %v1742 = vpop.f32.mrb[0].mxu0
    %1743 = vdwg.mxu0
    %1744 = vmatprep.subr.mxu0 0.0
    %v1745 = vand.u32 %v71, 4294901760
    %1746 = vmatpush1.msra.mxu0 %v1745
    %1747 = vmatprep.subr.mxu0 0.0
    %v1748 = vand.u32 %v72, 4294901760
    %1749 = vmatpush1.msra.mxu0 %v1748
    %1750 = vmatprep.subr.mxu0 0.0
    %v1751 = vand.u32 %v73, 4294901760
    %1752 = vmatpush1.msra.mxu0 %v1751
    %1753 = vmatprep.subr.mxu0 0.0
    %v1754 = vand.u32 %v74, 4294901760
    %1755 = vmatpush1.msra.mxu0 %v1754
    %1756 = vmatprep.subr.mxu0 0.0
    %v1757 = vand.u32 %v75, 4294901760
    %1758 = vmatpush1.msra.mxu0 %v1757
    %1759 = vmatprep.subr.mxu0 0.0
    %v1760 = vand.u32 %v76, 4294901760
    %1761 = vmatpush1.msra.mxu0 %v1760
    %1762 = vmatprep.subr.mxu0 0.0
    %v1763 = vand.u32 %v77, 4294901760
    %1764 = vmatpush1.msra.mxu0 %v1763
    %1765 = vmatprep.subr.mxu0 0.0
    %v1766 = vand.u32 %v78, 4294901760
    %1767 = vmatpush1.msra.mxu0 %v1766
    %1768 = vmatprep.subr.mxu0 0.0
    %v1769 = vand.u32 %v79, 4294901760
    %1770 = vmatpush1.msra.mxu0 %v1769
    %1771 = vmatprep.subr.mxu0 0.0
    %v1772 = vand.u32 %v80, 4294901760
    %1773 = vmatpush1.msra.mxu0 %v1772
    %1774 = vmatprep.subr.mxu0 0.0
    %v1775 = vand.u32 %v81, 4294901760
    %1776 = vmatpush1.msra.mxu0 %v1775
    %1777 = vmatprep.subr.mxu0 0.0
    %v1778 = vand.u32 %v82, 4294901760
    %1779 = vmatpush1.msra.mxu0 %v1778
    %1780 = vmatprep.subr.mxu0 0.0
    %v1781 = vand.u32 %v83, 4294901760
    %1782 = vmatpush1.msra.mxu0 %v1781
    %1783 = vmatprep.subr.mxu0 0.0
    %v1784 = vand.u32 %v84, 4294901760
    %1785 = vmatpush1.msra.mxu0 %v1784
    %1786 = vmatprep.subr.mxu0 0.0
    %v1787 = vand.u32 %v85, 4294901760
    %1788 = vmatpush1.msra.mxu0 %v1787
    %1789 = vmatprep.subr.mxu0 0.0
    %v1790 = vand.u32 %v86, 4294901760
    %1791 = vmatpush1.msra.mxu0 %v1790
    %1792 = vmatprep.subr.mxu0 0.0
    %v1793 = vand.u32 %v87, 4294901760
    %1794 = vmatpush1.msra.mxu0 %v1793
    %1795 = vmatprep.subr.mxu0 0.0
    %v1796 = vand.u32 %v88, 4294901760
    %1797 = vmatpush1.msra.mxu0 %v1796
    %1798 = vmatprep.subr.mxu0 0.0
    %v1799 = vand.u32 %v89, 4294901760
    %1800 = vmatpush1.msra.mxu0 %v1799
    %1801 = vmatprep.subr.mxu0 0.0
    %v1802 = vand.u32 %v90, 4294901760
    %1803 = vmatpush1.msra.mxu0 %v1802
    %1804 = vmatprep.subr.mxu0 0.0
    %v1805 = vand.u32 %v91, 4294901760
    %1806 = vmatpush1.msra.mxu0 %v1805
    %1807 = vmatprep.subr.mxu0 0.0
    %v1808 = vand.u32 %v92, 4294901760
    %1809 = vmatpush1.msra.mxu0 %v1808
    %1810 = vmatprep.subr.mxu0 0.0
    %v1811 = vand.u32 %v93, 4294901760
    %1812 = vmatpush1.msra.mxu0 %v1811
    %1813 = vmatprep.subr.mxu0 0.0
    %v1814 = vand.u32 %v94, 4294901760
    %1815 = vmatpush1.msra.mxu0 %v1814
    %1816 = vmatprep.subr.mxu0 0.0
    %v1817 = vand.u32 %v95, 4294901760
    %1818 = vmatpush1.msra.mxu0 %v1817
    %1819 = vmatprep.subr.mxu0 0.0
    %v1820 = vand.u32 %v96, 4294901760
    %1821 = vmatpush1.msra.mxu0 %v1820
    %1822 = vmatprep.subr.mxu0 0.0
    %v1823 = vand.u32 %v97, 4294901760
    %1824 = vmatpush1.msra.mxu0 %v1823
    %1825 = vmatprep.subr.mxu0 0.0
    %v1826 = vand.u32 %v98, 4294901760
    %1827 = vmatpush1.msra.mxu0 %v1826
    %1828 = vmatprep.subr.mxu0 0.0
    %v1829 = vand.u32 %v99, 4294901760
    %1830 = vmatpush1.msra.mxu0 %v1829
    %1831 = vmatprep.subr.mxu0 0.0
    %v1832 = vand.u32 %v100, 4294901760
    %1833 = vmatpush1.msra.mxu0 %v1832
    %1834 = vmatprep.subr.mxu0 0.0
    %v1835 = vand.u32 %v101, 4294901760
    %1836 = vmatpush1.msra.mxu0 %v1835
    %1837 = vmatprep.subr.mxu0 0.0
    %v1838 = vand.u32 %v102, 4294901760
    %1839 = vmatpush1.msra.mxu0 %v1838
    %v1840 = vand.u32 %v119, 4294901760
    %1841 = vmatprep.mubr.f32.mxu0 %v1840
    %v1842 = vand.u32 %v115, 4294901760
    %1843 = vmatmul.mubr.f32.gmra.mrb[0].mxu0 %v1842
    %v1844 = vpop.f32.mrb[0].mxu0
    %v1845 = vadd.f32 %v1741, %v1844
    %v1846 = vpop.f32.mrb[0].mxu0
    %1847 = vdwg.mxu0
    %1848 = vst [vmem:[#allocation7] sm:$0x1] %v1845
    // Predicated region
    $region18: #{tpu_custom_call.1} parent=1 // pred_check
      _
    $region19: #{tpu_custom_call.1} parent=1 // pred_check_branch
      %1850 = sbr.rel (0) target = $region21
    $region20: #{tpu_custom_call.1} parent=1 // pred_region
      %s1852 = ssub.s32 16, 16
      %1853 = vsyncadd [#allocation4], %s1852
      %s1855 = sshll.u32 [#allocation7], 4
      %s1856 = int_to_ptr.vmem [resolvable:$true] %s1855
      %1858 = dma.vmem_to_hbm [thread:$0]  %s1856, 16, %s2, [#allocation4]
    $region21: #{tpu_custom_call.1} parent=1 // pred_fallthru
      _
    // Predicated region
    $region22: #{tpu_custom_call.1} parent=1 // pred_check
      _
    $region23: #{tpu_custom_call.1} parent=1 // pred_check_branch
      %1860 = sbr.rel (0) target = $region25
    $region24: #{tpu_custom_call.1} parent=1 // pred_region
      %1861 = dma.done [#allocation4], 16
    $region25: #{tpu_custom_call.1} parent=1 // pred_fallthru
      _
    %1862 = vsyncpa [#allocation3], 1
    %1863 = vsyncpa [#allocation6], 1
    %1864 = vsyncpa [#allocation4], 1

</llo_original>
